<compile_context>
chip_gen: v7x
topology: tpu7x:2x2x1
jax: 0.10.0
libtpu: 0.0.40
codegen_flags: <defaults>
</compile_context>

<pallas_src>
import numpy as np

import jax
import jax.numpy as jnp
from jax import lax
from jax.experimental import pallas as pl
from jax.experimental.pallas import tpu as pltpu


# ----------------------------------------------------------------------------
# Fused kernel: conv1+ReLU+pool1 -> conv2+ReLU+pool2 -> fc1+ReLU -> fc2+ReLU
# ----------------------------------------------------------------------------
def _mnist_fused_kernel(
    x_ref,                                # (tb, 28, 32)  input rows, width zero-padded 28->32
    w1_ref, b1_ref,                       # (5, 32, 256), (1, 128)
    w2_ref, b2_ref,                       # (5, 128, 256), (1, 128)
    wf1_ref, bf1_ref,                     # (4, 128, 128), (1, 128)
    wf2_ref, bf2_ref,                     # (128, 128), (1, 128)
    out_ref,                              # (tb, 1, 128)  padded logits
):
    tb = out_ref.shape[0]
    f32 = jnp.float32

    # ---- conv1 (banded MXU matmuls) + bias + ReLU + 2x2 max-pool ----------
    # acc1[n*24+h, c*12+u]       = conv1 output at (c, h, w=2u)   (even cols)
    # acc1[n*24+h, 128+c*12+u]   = conv1 output at (c, h, w=2u+1) (odd cols)
    acc1 = jnp.dot(x_ref[:, 0:24, :].reshape(tb * 24, 32), w1_ref[0],
                   preferred_element_type=f32)
    for i in range(1, 5):
        lhs = x_ref[:, i:i + 24, :].reshape(tb * 24, 32)
        acc1 = acc1 + jnp.dot(lhs, w1_ref[i], preferred_element_type=f32)
    m1 = jnp.maximum(acc1[:, :128], acc1[:, 128:])       # pool over width
    m1 = m1.reshape(tb, 12, 2, 128)
    m1 = jnp.maximum(m1[:, :, 0], m1[:, :, 1])           # pool over height
    # relu(max(.)+b) == pool(relu(.+b)); lanes: c*12 + u, c<10, u<12.
    p1 = jnp.maximum(m1 + b1_ref[...], 0.0)              # (tb, 12, 128)

    # ---- conv2 (banded MXU matmuls) + bias + ReLU + 2x2 max-pool ----------
    # Lanes of acc2: even cols d*4+u' in [0:128), odd cols in [128:256).
    acc2 = jnp.dot(p1[:, 0:8, :].reshape(tb * 8, 128), w2_ref[0],
                   preferred_element_type=f32)
    for i in range(1, 5):
        lhs = p1[:, i:i + 8, :].reshape(tb * 8, 128)
        acc2 = acc2 + jnp.dot(lhs, w2_ref[i], preferred_element_type=f32)
    m2 = jnp.maximum(acc2[:, :128], acc2[:, 128:])        # pool over width
    m2 = m2.reshape(tb, 4, 2, 128)
    m2 = jnp.maximum(m2[:, :, 0], m2[:, :, 1])            # pool over height
    p2 = jnp.maximum(m2 + b2_ref[...], 0.0)               # (tb, 4, 128) lanes d*4+w''

    # ---- flatten + fc1 + ReLU ---------------------------------------------
    # PyTorch flatten order (d, h'', w'') is baked into wf1's row permutation.
    h = jnp.dot(p2[:, 0, :], wf1_ref[0], preferred_element_type=f32)
    for r in range(1, 4):
        h = h + jnp.dot(p2[:, r, :], wf1_ref[r], preferred_element_type=f32)
    h = jnp.maximum(h + bf1_ref[...], 0.0)                # (tb, 128), 50 real lanes

    # ---- fc2 + ReLU, lane-dense (tb, 128) store ----------------------------
    out = jnp.dot(h, wf2_ref[...], preferred_element_type=f32) + bf2_ref[...]
    out_ref[:, 0, :] = jnp.maximum(out, 0.0)


# ----------------------------------------------------------------------------
# Host-side parameter packing (done once, outside the jitted forward)
# ----------------------------------------------------------------------------
def prepare_params(params):
    w1 = np.asarray(params["conv1_w"], np.float32)    # (10, 1, 5, 5)
    b1 = np.asarray(params["conv1_b"], np.float32)
    w2 = np.asarray(params["conv2_w"], np.float32)    # (20, 10, 5, 5)
    b2 = np.asarray(params["conv2_b"], np.float32)
    f1w = np.asarray(params["fc1_w"], np.float32)     # (50, 320)
    f1b = np.asarray(params["fc1_b"], np.float32)
    f2w = np.asarray(params["fc2_w"], np.float32)     # (10, 50)
    f2b = np.asarray(params["fc2_b"], np.float32)

    # conv1 banded matrices: B1[i][v, c*12+u]      = w1[c,0,i, v-2u]
    #                        B1[i][v, 128+c*12+u]  = w1[c,0,i, v-(2u+1)]
    B1 = np.zeros((5, 32, 256), np.float32)
    cols_c = np.arange(10) * 12
    for i in range(5):
        for j in range(5):
            for u in range(12):
                B1[i, 2 * u + j, cols_c + u] = w1[:, 0, i, j]
                B1[i, 2 * u + 1 + j, 128 + cols_c + u] = w1[:, 0, i, j]
    bb1 = np.zeros((1, 128), np.float32)
    bb1[0, :120] = np.repeat(b1, 12)

    # conv2 banded matrices over p1 lanes (c*12+v):
    #   B2[i][c*12+v, d*4+u']     = w2[d,c,i, v-2u']
    #   B2[i][c*12+v, 128+d*4+u'] = w2[d,c,i, v-(2u'+1)]
    B2 = np.zeros((5, 128, 256), np.float32)
    cols_d = np.arange(20) * 4
    for i in range(5):
        for j in range(5):
            for u in range(4):
                for c in range(10):
                    B2[i, c * 12 + 2 * u + j, cols_d + u] = w2[:, c, i, j]
                    B2[i, c * 12 + 2 * u + 1 + j, 128 + cols_d + u] = w2[:, c, i, j]
    bb2 = np.zeros((1, 128), np.float32)
    bb2[0, :80] = np.repeat(b2, 4)

    # fc1: kernel input features live at (h'', lane=d*4+w''); PyTorch feature
    # index is d*16 + h''*4 + w''.
    Wf1 = np.zeros((4, 128, 128), np.float32)
    f1r = f1w.reshape(50, 20, 4, 4)                   # (o, d, h, w)
    for h in range(4):
        for d in range(20):
            for w in range(4):
                Wf1[h, d * 4 + w, :50] = f1r[:, d, h, w]
    bf1 = np.zeros((1, 128), np.float32)
    bf1[0, :50] = f1b

    Wf2 = np.zeros((128, 128), np.float32)
    Wf2[:50, :10] = f2w.T
    bf2 = np.zeros((1, 128), np.float32)
    bf2[0, :10] = f2b

    packed = dict(w1=B1, b1=bb1, w2=B2, b2=bb2, wf1=Wf1, bf1=bf1, wf2=Wf2, bf2=bf2)
    return {k: jnp.asarray(v) for k, v in packed.items()}


def _pick_batch_tile(n):
    # Largest tb (<=16) that still leaves >= 4 grid steps, so pipelining and
    # v7x megacore sharding have work; for tiny batches fall back to one step.
    for tb in (16, 8, 4, 2):
        if n >= 4 * tb:
            return tb
    return max(1, min(n, 16))


@jax.jit
def mnist_convnet_forward(prepped, x):
    """x: (N, 1, 28, 28) float32 -> logits (N, 10)."""
    n = x.shape[0]
    assert x.shape[1:] == (1, 28, 28)
    tb = _pick_batch_tile(n)
    grid_n = -(-n // tb)
    n_pad = grid_n * tb

    # Single lane-packed input block per image: width zero-padded 28 -> 32
    # (also the matmul K dim), batch zero-padded to a multiple of tb.
    xs = x[:, 0].astype(jnp.float32)
    xs = jnp.pad(xs, ((0, n_pad - n), (0, 0), (0, 4)))   # (n_pad, 28, 32)

    out = pl.pallas_call(
        _mnist_fused_kernel,
        out_shape=jax.ShapeDtypeStruct((n_pad, 1, 128), jnp.float32),
        grid=(grid_n,),
        in_specs=[
            pl.BlockSpec((tb, 28, 32), lambda i: (i, 0, 0)),     # input rows
            pl.BlockSpec((5, 32, 256), lambda i: (0, 0, 0)),     # conv1 banded W
            pl.BlockSpec((1, 128), lambda i: (0, 0)),            # conv1 bias
            pl.BlockSpec((5, 128, 256), lambda i: (0, 0, 0)),    # conv2 banded W
            pl.BlockSpec((1, 128), lambda i: (0, 0)),            # conv2 bias
            pl.BlockSpec((4, 128, 128), lambda i: (0, 0, 0)),    # fc1 W (per h'')
            pl.BlockSpec((1, 128), lambda i: (0, 0)),            # fc1 bias
            pl.BlockSpec((128, 128), lambda i: (0, 0)),          # fc2 W
            pl.BlockSpec((1, 128), lambda i: (0, 0)),            # fc2 bias
        ],
        out_specs=pl.BlockSpec((tb, 1, 128), lambda i: (i, 0, 0)),
        compiler_params=pltpu.CompilerParams(
            dimension_semantics=("parallel",),
            vmem_limit_bytes=32 * 1024 * 1024,
        ),
    )(xs, prepped["w1"], prepped["b1"], prepped["w2"], prepped["b2"],
      prepped["wf1"], prepped["bf1"], prepped["wf2"], prepped["bf2"])

    return out[:n, 0, :10]


# ----------------------------------------------------------------------------
# Parameter init (PyTorch nn.Conv2d / nn.Linear style) + pure-JAX reference
# ----------------------------------------------------------------------------
def init_params(key):
    def uniform(key, shape, fan_in):
        bound = 1.0 / jnp.sqrt(jnp.float32(fan_in))
        return jax.random.uniform(key, shape, jnp.float32, -bound, bound)

    ks = jax.random.split(key, 8)
    return {
        "conv1_w": uniform(ks[0], (10, 1, 5, 5), 1 * 5 * 5),
        "conv1_b": uniform(ks[1], (10,), 1 * 5 * 5),
        "conv2_w": uniform(ks[2], (20, 10, 5, 5), 10 * 5 * 5),
        "conv2_b": uniform(ks[3], (20,), 10 * 5 * 5),
        "fc1_w": uniform(ks[4], (50, 320), 320),
        "fc1_b": uniform(ks[5], (50,), 320),
        "fc2_w": uniform(ks[6], (10, 50), 50),
        "fc2_b": uniform(ks[7], (10,), 50),
    }


def reference_forward(params, x):
    dn = ("NCHW", "OIHW", "NCHW")
    hp = lax.Precision.HIGHEST

    def conv(x, w, b):
        y = lax.conv_general_dilated(x, w, (1, 1), "VALID",
                                     dimension_numbers=dn, precision=hp)
        return jnp.maximum(y + b.reshape(1, -1, 1, 1), 0.0)

    def pool(x):
        return lax.reduce_window(x, -jnp.inf, lax.max,
                                 (1, 1, 2, 2), (1, 1, 2, 2), "VALID")

    x = pool(conv(x, params["conv1_w"], params["conv1_b"]))
    x = pool(conv(x, params["conv2_w"], params["conv2_b"]))
    x = x.reshape(x.shape[0], -1)
    x = jnp.maximum(jnp.dot(x, params["fc1_w"].T, precision=hp)
                    + params["fc1_b"], 0.0)
    x = jnp.maximum(jnp.dot(x, params["fc2_w"].T, precision=hp)
                    + params["fc2_b"], 0.0)
    return x


if __name__ == "__main__":
    key = jax.random.PRNGKey(0)
    pkey, xkey = jax.random.split(key)
    params = init_params(pkey)
    prepped = prepare_params(params)

    # Spatial size must be 28x28 so the flatten yields 320 features
    # (fc1 = Linear(320, 50)).  Small batch of 8 -> tb=2, 4 pipelined steps.
    x = jax.random.normal(xkey, (8, 1, 28, 28), jnp.float32)

    out = jax.block_until_ready(mnist_convnet_forward(prepped, x))
    ref = reference_forward(params, x)

    assert out.shape == (8, 10)
    assert jnp.allclose(out, ref, atol=1e-3, rtol=1e-3), \
        float(jnp.max(jnp.abs(out - ref)))

    print("KERNEL_OK")
</pallas_src>

<mosaic_0001>
module attributes {stable_mosaic.version = 11 : i64} {
  func.func @_mnist_fused_kernel(%arg0: i32, %arg1: memref<2x28x32xf32, #tpu.memory_space<vmem>>, %arg2: memref<5x32x256xf32, #tpu.memory_space<vmem>>, %arg3: memref<1x128xf32, #tpu.memory_space<vmem>>, %arg4: memref<5x128x256xf32, #tpu.memory_space<vmem>>, %arg5: memref<1x128xf32, #tpu.memory_space<vmem>>, %arg6: memref<4x128x128xf32, #tpu.memory_space<vmem>>, %arg7: memref<1x128xf32, #tpu.memory_space<vmem>>, %arg8: memref<128x128xf32, #tpu.memory_space<vmem>>, %arg9: memref<1x128xf32, #tpu.memory_space<vmem>>, %arg10: memref<2x1x128xf32, #tpu.memory_space<vmem>>) attributes {dimension_semantics = [#tpu.dimension_semantics<parallel>], iteration_bounds = array<i64: 4>, scalar_prefetch = 0 : i64, scratch_operands = 0 : i64, tpu.core_type = #tpu.core_type<tc>, window_params = [{transform_indices = @transform_0, window_bounds = array<i64: 2, 28, 32>}, {pipeline_mode = #tpu.pipeline_mode<synchronous>, transform_indices = @transform_1, window_bounds = array<i64: 5, 32, 256>}, {pipeline_mode = #tpu.pipeline_mode<synchronous>, transform_indices = @transform_2, window_bounds = array<i64: 1, 128>}, {pipeline_mode = #tpu.pipeline_mode<synchronous>, transform_indices = @transform_3, window_bounds = array<i64: 5, 128, 256>}, {pipeline_mode = #tpu.pipeline_mode<synchronous>, transform_indices = @transform_4, window_bounds = array<i64: 1, 128>}, {pipeline_mode = #tpu.pipeline_mode<synchronous>, transform_indices = @transform_5, window_bounds = array<i64: 4, 128, 128>}, {pipeline_mode = #tpu.pipeline_mode<synchronous>, transform_indices = @transform_6, window_bounds = array<i64: 1, 128>}, {pipeline_mode = #tpu.pipeline_mode<synchronous>, transform_indices = @transform_7, window_bounds = array<i64: 128, 128>}, {pipeline_mode = #tpu.pipeline_mode<synchronous>, transform_indices = @transform_8, window_bounds = array<i64: 1, 128>}, {transform_indices = @transform_9, window_bounds = array<i64: 2, 1, 128>}]} {
    %c0 = arith.constant 0 : index
    %c0_0 = arith.constant 0 : index
    %c0_1 = arith.constant 0 : index
    %0 = vector.load %arg1[%c0, %c0_0, %c0_1] : memref<2x28x32xf32, #tpu.memory_space<vmem>>, vector<2x24x32xf32>
    %1 = vector.shape_cast %0 : vector<2x24x32xf32> to vector<48x32xf32>
    %c0_2 = arith.constant 0 : index
    %c0_3 = arith.constant 0 : index
    %c0_4 = arith.constant 0 : index
    %2 = vector.load %arg2[%c0_2, %c0_3, %c0_4] : memref<5x32x256xf32, #tpu.memory_space<vmem>>, vector<1x32x256xf32>
    %3 = vector.shape_cast %2 : vector<1x32x256xf32> to vector<32x256xf32>
    %cst = arith.constant dense<0.000000e+00> : vector<48x256xf32>
    %4 = tpu.matmul %1, %3, %cst {dimension_numbers = #tpu.dot_dimension_numbers<[1], [0], [0], [1], [0, 0, 1, 1], [], []>} : vector<48x32xf32>, vector<32x256xf32>, vector<48x256xf32> -> vector<48x256xf32>
    %c0_5 = arith.constant 0 : index
    %c1 = arith.constant 1 : index
    %c0_6 = arith.constant 0 : index
    %5 = vector.load %arg1[%c0_5, %c1, %c0_6] : memref<2x28x32xf32, #tpu.memory_space<vmem>>, vector<2x24x32xf32>
    %6 = vector.shape_cast %5 : vector<2x24x32xf32> to vector<48x32xf32>
    %c1_7 = arith.constant 1 : index
    %c0_8 = arith.constant 0 : index
    %c0_9 = arith.constant 0 : index
    %7 = vector.load %arg2[%c1_7, %c0_8, %c0_9] : memref<5x32x256xf32, #tpu.memory_space<vmem>>, vector<1x32x256xf32>
    %8 = vector.shape_cast %7 : vector<1x32x256xf32> to vector<32x256xf32>
    %cst_10 = arith.constant dense<0.000000e+00> : vector<48x256xf32>
    %9 = tpu.matmul %6, %8, %cst_10 {dimension_numbers = #tpu.dot_dimension_numbers<[1], [0], [0], [1], [0, 0, 1, 1], [], []>} : vector<48x32xf32>, vector<32x256xf32>, vector<48x256xf32> -> vector<48x256xf32>
    %10 = arith.addf %4, %9 : vector<48x256xf32>
    %c0_11 = arith.constant 0 : index
    %c2 = arith.constant 2 : index
    %c0_12 = arith.constant 0 : index
    %11 = vector.load %arg1[%c0_11, %c2, %c0_12] : memref<2x28x32xf32, #tpu.memory_space<vmem>>, vector<2x24x32xf32>
    %12 = vector.shape_cast %11 : vector<2x24x32xf32> to vector<48x32xf32>
    %c2_13 = arith.constant 2 : index
    %c0_14 = arith.constant 0 : index
    %c0_15 = arith.constant 0 : index
    %13 = vector.load %arg2[%c2_13, %c0_14, %c0_15] : memref<5x32x256xf32, #tpu.memory_space<vmem>>, vector<1x32x256xf32>
    %14 = vector.shape_cast %13 : vector<1x32x256xf32> to vector<32x256xf32>
    %cst_16 = arith.constant dense<0.000000e+00> : vector<48x256xf32>
    %15 = tpu.matmul %12, %14, %cst_16 {dimension_numbers = #tpu.dot_dimension_numbers<[1], [0], [0], [1], [0, 0, 1, 1], [], []>} : vector<48x32xf32>, vector<32x256xf32>, vector<48x256xf32> -> vector<48x256xf32>
    %16 = arith.addf %10, %15 : vector<48x256xf32>
    %c0_17 = arith.constant 0 : index
    %c3 = arith.constant 3 : index
    %c0_18 = arith.constant 0 : index
    %17 = vector.load %arg1[%c0_17, %c3, %c0_18] : memref<2x28x32xf32, #tpu.memory_space<vmem>>, vector<2x24x32xf32>
    %18 = vector.shape_cast %17 : vector<2x24x32xf32> to vector<48x32xf32>
    %c3_19 = arith.constant 3 : index
    %c0_20 = arith.constant 0 : index
    %c0_21 = arith.constant 0 : index
    %19 = vector.load %arg2[%c3_19, %c0_20, %c0_21] : memref<5x32x256xf32, #tpu.memory_space<vmem>>, vector<1x32x256xf32>
    %20 = vector.shape_cast %19 : vector<1x32x256xf32> to vector<32x256xf32>
    %cst_22 = arith.constant dense<0.000000e+00> : vector<48x256xf32>
    %21 = tpu.matmul %18, %20, %cst_22 {dimension_numbers = #tpu.dot_dimension_numbers<[1], [0], [0], [1], [0, 0, 1, 1], [], []>} : vector<48x32xf32>, vector<32x256xf32>, vector<48x256xf32> -> vector<48x256xf32>
    %22 = arith.addf %16, %21 : vector<48x256xf32>
    %c0_23 = arith.constant 0 : index
    %c4 = arith.constant 4 : index
    %c0_24 = arith.constant 0 : index
    %23 = vector.load %arg1[%c0_23, %c4, %c0_24] : memref<2x28x32xf32, #tpu.memory_space<vmem>>, vector<2x24x32xf32>
    %24 = vector.shape_cast %23 : vector<2x24x32xf32> to vector<48x32xf32>
    %c4_25 = arith.constant 4 : index
    %c0_26 = arith.constant 0 : index
    %c0_27 = arith.constant 0 : index
    %25 = vector.load %arg2[%c4_25, %c0_26, %c0_27] : memref<5x32x256xf32, #tpu.memory_space<vmem>>, vector<1x32x256xf32>
    %26 = vector.shape_cast %25 : vector<1x32x256xf32> to vector<32x256xf32>
    %cst_28 = arith.constant dense<0.000000e+00> : vector<48x256xf32>
    %27 = tpu.matmul %24, %26, %cst_28 {dimension_numbers = #tpu.dot_dimension_numbers<[1], [0], [0], [1], [0, 0, 1, 1], [], []>} : vector<48x32xf32>, vector<32x256xf32>, vector<48x256xf32> -> vector<48x256xf32>
    %28 = arith.addf %22, %27 : vector<48x256xf32>
    %29 = vector.extract_strided_slice %28 {offsets = [0, 0], sizes = [48, 128], strides = [1, 1]} : vector<48x256xf32> to vector<48x128xf32>
    %30 = vector.extract_strided_slice %28 {offsets = [0, 128], sizes = [48, 128], strides = [1, 1]} : vector<48x256xf32> to vector<48x128xf32>
    %31 = arith.maximumf %29, %30 : vector<48x128xf32>
    %32 = vector.shape_cast %31 : vector<48x128xf32> to vector<2x12x2x128xf32>
    %33 = vector.extract_strided_slice %32 {offsets = [0, 0, 0, 0], sizes = [2, 12, 1, 128], strides = [1, 1, 1, 1]} : vector<2x12x2x128xf32> to vector<2x12x1x128xf32>
    %34 = vector.shape_cast %33 : vector<2x12x1x128xf32> to vector<2x12x128xf32>
    %35 = vector.extract_strided_slice %32 {offsets = [0, 0, 1, 0], sizes = [2, 12, 1, 128], strides = [1, 1, 1, 1]} : vector<2x12x2x128xf32> to vector<2x12x1x128xf32>
    %36 = vector.shape_cast %35 : vector<2x12x1x128xf32> to vector<2x12x128xf32>
    %37 = arith.maximumf %34, %36 : vector<2x12x128xf32>
    %c0_29 = arith.constant 0 : index
    %c0_30 = arith.constant 0 : index
    %38 = vector.load %arg3[%c0_29, %c0_30] : memref<1x128xf32, #tpu.memory_space<vmem>>, vector<1x128xf32>
    %39 = vector.shape_cast %38 : vector<1x128xf32> to vector<1x1x128xf32>
    %40 = vector.broadcast %39 : vector<1x1x128xf32> to vector<2x12x128xf32>
    %41 = arith.addf %37, %40 : vector<2x12x128xf32>
    %cst_31 = arith.constant 0.000000e+00 : f32
    %42 = vector.broadcast %cst_31 : f32 to vector<2x12x128xf32>
    %43 = arith.maximumf %41, %42 : vector<2x12x128xf32>
    %44 = vector.extract_strided_slice %43 {offsets = [0, 0, 0], sizes = [2, 8, 128], strides = [1, 1, 1]} : vector<2x12x128xf32> to vector<2x8x128xf32>
    %45 = vector.shape_cast %44 : vector<2x8x128xf32> to vector<16x128xf32>
    %c0_32 = arith.constant 0 : index
    %c0_33 = arith.constant 0 : index
    %c0_34 = arith.constant 0 : index
    %46 = vector.load %arg4[%c0_32, %c0_33, %c0_34] : memref<5x128x256xf32, #tpu.memory_space<vmem>>, vector<1x128x256xf32>
    %47 = vector.shape_cast %46 : vector<1x128x256xf32> to vector<128x256xf32>
    %cst_35 = arith.constant dense<0.000000e+00> : vector<16x256xf32>
    %48 = tpu.matmul %45, %47, %cst_35 {dimension_numbers = #tpu.dot_dimension_numbers<[1], [0], [0], [1], [0, 0, 1, 1], [], []>} : vector<16x128xf32>, vector<128x256xf32>, vector<16x256xf32> -> vector<16x256xf32>
    %49 = vector.extract_strided_slice %43 {offsets = [0, 1, 0], sizes = [2, 8, 128], strides = [1, 1, 1]} : vector<2x12x128xf32> to vector<2x8x128xf32>
    %50 = vector.shape_cast %49 : vector<2x8x128xf32> to vector<16x128xf32>
    %c1_36 = arith.constant 1 : index
    %c0_37 = arith.constant 0 : index
    %c0_38 = arith.constant 0 : index
    %51 = vector.load %arg4[%c1_36, %c0_37, %c0_38] : memref<5x128x256xf32, #tpu.memory_space<vmem>>, vector<1x128x256xf32>
    %52 = vector.shape_cast %51 : vector<1x128x256xf32> to vector<128x256xf32>
    %cst_39 = arith.constant dense<0.000000e+00> : vector<16x256xf32>
    %53 = tpu.matmul %50, %52, %cst_39 {dimension_numbers = #tpu.dot_dimension_numbers<[1], [0], [0], [1], [0, 0, 1, 1], [], []>} : vector<16x128xf32>, vector<128x256xf32>, vector<16x256xf32> -> vector<16x256xf32>
    %54 = arith.addf %48, %53 : vector<16x256xf32>
    %55 = vector.extract_strided_slice %43 {offsets = [0, 2, 0], sizes = [2, 8, 128], strides = [1, 1, 1]} : vector<2x12x128xf32> to vector<2x8x128xf32>
    %56 = vector.shape_cast %55 : vector<2x8x128xf32> to vector<16x128xf32>
    %c2_40 = arith.constant 2 : index
    %c0_41 = arith.constant 0 : index
    %c0_42 = arith.constant 0 : index
    %57 = vector.load %arg4[%c2_40, %c0_41, %c0_42] : memref<5x128x256xf32, #tpu.memory_space<vmem>>, vector<1x128x256xf32>
    %58 = vector.shape_cast %57 : vector<1x128x256xf32> to vector<128x256xf32>
    %cst_43 = arith.constant dense<0.000000e+00> : vector<16x256xf32>
    %59 = tpu.matmul %56, %58, %cst_43 {dimension_numbers = #tpu.dot_dimension_numbers<[1], [0], [0], [1], [0, 0, 1, 1], [], []>} : vector<16x128xf32>, vector<128x256xf32>, vector<16x256xf32> -> vector<16x256xf32>
    %60 = arith.addf %54, %59 : vector<16x256xf32>
    %61 = vector.extract_strided_slice %43 {offsets = [0, 3, 0], sizes = [2, 8, 128], strides = [1, 1, 1]} : vector<2x12x128xf32> to vector<2x8x128xf32>
    %62 = vector.shape_cast %61 : vector<2x8x128xf32> to vector<16x128xf32>
    %c3_44 = arith.constant 3 : index
    %c0_45 = arith.constant 0 : index
    %c0_46 = arith.constant 0 : index
    %63 = vector.load %arg4[%c3_44, %c0_45, %c0_46] : memref<5x128x256xf32, #tpu.memory_space<vmem>>, vector<1x128x256xf32>
    %64 = vector.shape_cast %63 : vector<1x128x256xf32> to vector<128x256xf32>
    %cst_47 = arith.constant dense<0.000000e+00> : vector<16x256xf32>
    %65 = tpu.matmul %62, %64, %cst_47 {dimension_numbers = #tpu.dot_dimension_numbers<[1], [0], [0], [1], [0, 0, 1, 1], [], []>} : vector<16x128xf32>, vector<128x256xf32>, vector<16x256xf32> -> vector<16x256xf32>
    %66 = arith.addf %60, %65 : vector<16x256xf32>
    %67 = vector.extract_strided_slice %43 {offsets = [0, 4, 0], sizes = [2, 8, 128], strides = [1, 1, 1]} : vector<2x12x128xf32> to vector<2x8x128xf32>
    %68 = vector.shape_cast %67 : vector<2x8x128xf32> to vector<16x128xf32>
    %c4_48 = arith.constant 4 : index
    %c0_49 = arith.constant 0 : index
    %c0_50 = arith.constant 0 : index
    %69 = vector.load %arg4[%c4_48, %c0_49, %c0_50] : memref<5x128x256xf32, #tpu.memory_space<vmem>>, vector<1x128x256xf32>
    %70 = vector.shape_cast %69 : vector<1x128x256xf32> to vector<128x256xf32>
    %cst_51 = arith.constant dense<0.000000e+00> : vector<16x256xf32>
    %71 = tpu.matmul %68, %70, %cst_51 {dimension_numbers = #tpu.dot_dimension_numbers<[1], [0], [0], [1], [0, 0, 1, 1], [], []>} : vector<16x128xf32>, vector<128x256xf32>, vector<16x256xf32> -> vector<16x256xf32>
    %72 = arith.addf %66, %71 : vector<16x256xf32>
    %73 = vector.extract_strided_slice %72 {offsets = [0, 0], sizes = [16, 128], strides = [1, 1]} : vector<16x256xf32> to vector<16x128xf32>
    %74 = vector.extract_strided_slice %72 {offsets = [0, 128], sizes = [16, 128], strides = [1, 1]} : vector<16x256xf32> to vector<16x128xf32>
    %75 = arith.maximumf %73, %74 : vector<16x128xf32>
    %76 = vector.shape_cast %75 : vector<16x128xf32> to vector<2x4x2x128xf32>
    %77 = vector.extract_strided_slice %76 {offsets = [0, 0, 0, 0], sizes = [2, 4, 1, 128], strides = [1, 1, 1, 1]} : vector<2x4x2x128xf32> to vector<2x4x1x128xf32>
    %78 = vector.shape_cast %77 : vector<2x4x1x128xf32> to vector<2x4x128xf32>
    %79 = vector.extract_strided_slice %76 {offsets = [0, 0, 1, 0], sizes = [2, 4, 1, 128], strides = [1, 1, 1, 1]} : vector<2x4x2x128xf32> to vector<2x4x1x128xf32>
    %80 = vector.shape_cast %79 : vector<2x4x1x128xf32> to vector<2x4x128xf32>
    %81 = arith.maximumf %78, %80 : vector<2x4x128xf32>
    %c0_52 = arith.constant 0 : index
    %c0_53 = arith.constant 0 : index
    %82 = vector.load %arg5[%c0_52, %c0_53] : memref<1x128xf32, #tpu.memory_space<vmem>>, vector<1x128xf32>
    %83 = vector.shape_cast %82 : vector<1x128xf32> to vector<1x1x128xf32>
    %84 = vector.broadcast %83 : vector<1x1x128xf32> to vector<2x4x128xf32>
    %85 = arith.addf %81, %84 : vector<2x4x128xf32>
    %cst_54 = arith.constant 0.000000e+00 : f32
    %86 = vector.broadcast %cst_54 : f32 to vector<2x4x128xf32>
    %87 = arith.maximumf %85, %86 : vector<2x4x128xf32>
    %88 = vector.extract_strided_slice %87 {offsets = [0, 0, 0], sizes = [2, 1, 128], strides = [1, 1, 1]} : vector<2x4x128xf32> to vector<2x1x128xf32>
    %89 = vector.shape_cast %88 : vector<2x1x128xf32> to vector<2x128xf32>
    %c0_55 = arith.constant 0 : index
    %c0_56 = arith.constant 0 : index
    %c0_57 = arith.constant 0 : index
    %90 = vector.load %arg6[%c0_55, %c0_56, %c0_57] : memref<4x128x128xf32, #tpu.memory_space<vmem>>, vector<1x128x128xf32>
    %91 = vector.shape_cast %90 : vector<1x128x128xf32> to vector<128x128xf32>
    %cst_58 = arith.constant dense<0.000000e+00> : vector<2x128xf32>
    %92 = tpu.matmul %89, %91, %cst_58 {dimension_numbers = #tpu.dot_dimension_numbers<[1], [0], [0], [1], [0, 0, 1, 1], [], []>} : vector<2x128xf32>, vector<128x128xf32>, vector<2x128xf32> -> vector<2x128xf32>
    %93 = vector.extract_strided_slice %87 {offsets = [0, 1, 0], sizes = [2, 1, 128], strides = [1, 1, 1]} : vector<2x4x128xf32> to vector<2x1x128xf32>
    %94 = vector.shape_cast %93 : vector<2x1x128xf32> to vector<2x128xf32>
    %c1_59 = arith.constant 1 : index
    %c0_60 = arith.constant 0 : index
    %c0_61 = arith.constant 0 : index
    %95 = vector.load %arg6[%c1_59, %c0_60, %c0_61] : memref<4x128x128xf32, #tpu.memory_space<vmem>>, vector<1x128x128xf32>
    %96 = vector.shape_cast %95 : vector<1x128x128xf32> to vector<128x128xf32>
    %cst_62 = arith.constant dense<0.000000e+00> : vector<2x128xf32>
    %97 = tpu.matmul %94, %96, %cst_62 {dimension_numbers = #tpu.dot_dimension_numbers<[1], [0], [0], [1], [0, 0, 1, 1], [], []>} : vector<2x128xf32>, vector<128x128xf32>, vector<2x128xf32> -> vector<2x128xf32>
    %98 = arith.addf %92, %97 : vector<2x128xf32>
    %99 = vector.extract_strided_slice %87 {offsets = [0, 2, 0], sizes = [2, 1, 128], strides = [1, 1, 1]} : vector<2x4x128xf32> to vector<2x1x128xf32>
    %100 = vector.shape_cast %99 : vector<2x1x128xf32> to vector<2x128xf32>
    %c2_63 = arith.constant 2 : index
    %c0_64 = arith.constant 0 : index
    %c0_65 = arith.constant 0 : index
    %101 = vector.load %arg6[%c2_63, %c0_64, %c0_65] : memref<4x128x128xf32, #tpu.memory_space<vmem>>, vector<1x128x128xf32>
    %102 = vector.shape_cast %101 : vector<1x128x128xf32> to vector<128x128xf32>
    %cst_66 = arith.constant dense<0.000000e+00> : vector<2x128xf32>
    %103 = tpu.matmul %100, %102, %cst_66 {dimension_numbers = #tpu.dot_dimension_numbers<[1], [0], [0], [1], [0, 0, 1, 1], [], []>} : vector<2x128xf32>, vector<128x128xf32>, vector<2x128xf32> -> vector<2x128xf32>
    %104 = arith.addf %98, %103 : vector<2x128xf32>
    %105 = vector.extract_strided_slice %87 {offsets = [0, 3, 0], sizes = [2, 1, 128], strides = [1, 1, 1]} : vector<2x4x128xf32> to vector<2x1x128xf32>
    %106 = vector.shape_cast %105 : vector<2x1x128xf32> to vector<2x128xf32>
    %c3_67 = arith.constant 3 : index
    %c0_68 = arith.constant 0 : index
    %c0_69 = arith.constant 0 : index
    %107 = vector.load %arg6[%c3_67, %c0_68, %c0_69] : memref<4x128x128xf32, #tpu.memory_space<vmem>>, vector<1x128x128xf32>
    %108 = vector.shape_cast %107 : vector<1x128x128xf32> to vector<128x128xf32>
    %cst_70 = arith.constant dense<0.000000e+00> : vector<2x128xf32>
    %109 = tpu.matmul %106, %108, %cst_70 {dimension_numbers = #tpu.dot_dimension_numbers<[1], [0], [0], [1], [0, 0, 1, 1], [], []>} : vector<2x128xf32>, vector<128x128xf32>, vector<2x128xf32> -> vector<2x128xf32>
    %110 = arith.addf %104, %109 : vector<2x128xf32>
    %c0_71 = arith.constant 0 : index
    %c0_72 = arith.constant 0 : index
    %111 = vector.load %arg7[%c0_71, %c0_72] : memref<1x128xf32, #tpu.memory_space<vmem>>, vector<1x128xf32>
    %112 = vector.broadcast %111 : vector<1x128xf32> to vector<2x128xf32>
    %113 = arith.addf %110, %112 : vector<2x128xf32>
    %cst_73 = arith.constant 0.000000e+00 : f32
    %114 = vector.broadcast %cst_73 : f32 to vector<2x128xf32>
    %115 = arith.maximumf %113, %114 : vector<2x128xf32>
    %c0_74 = arith.constant 0 : index
    %c0_75 = arith.constant 0 : index
    %116 = vector.load %arg8[%c0_74, %c0_75] : memref<128x128xf32, #tpu.memory_space<vmem>>, vector<128x128xf32>
    %cst_76 = arith.constant dense<0.000000e+00> : vector<2x128xf32>
    %117 = tpu.matmul %115, %116, %cst_76 {dimension_numbers = #tpu.dot_dimension_numbers<[1], [0], [0], [1], [0, 0, 1, 1], [], []>} : vector<2x128xf32>, vector<128x128xf32>, vector<2x128xf32> -> vector<2x128xf32>
    %c0_77 = arith.constant 0 : index
    %c0_78 = arith.constant 0 : index
    %118 = vector.load %arg9[%c0_77, %c0_78] : memref<1x128xf32, #tpu.memory_space<vmem>>, vector<1x128xf32>
    %119 = vector.broadcast %118 : vector<1x128xf32> to vector<2x128xf32>
    %120 = arith.addf %117, %119 : vector<2x128xf32>
    %cst_79 = arith.constant 0.000000e+00 : f32
    %121 = vector.broadcast %cst_79 : f32 to vector<2x128xf32>
    %122 = arith.maximumf %120, %121 : vector<2x128xf32>
    %c0_80 = arith.constant 0 : index
    %c0_81 = arith.constant 0 : index
    %c0_82 = arith.constant 0 : index
    %123 = vector.load %arg10[%c0_80, %c0_81, %c0_82] : memref<2x1x128xf32, #tpu.memory_space<vmem>>, vector<2x1x128xf32>
    %124 = vector.shape_cast %123 : vector<2x1x128xf32> to vector<2x128xf32>
    %125 = vector.shape_cast %122 : vector<2x128xf32> to vector<2x1x128xf32>
    tpu.vector_store %arg10[%c0_80, %c0_81, %c0_82], %125 {strides = array<i32>} : memref<2x1x128xf32, #tpu.memory_space<vmem>>, vector<2x1x128xf32>,
    return
  }
  func.func @transform_0(%arg0: i32) -> (i32, i32, i32) {
    %c0_i32 = arith.constant 0 : i32
    %c0_i32_0 = arith.constant 0 : i32
    %c0_i32_1 = arith.constant 0 : i32
    return %arg0, %c0_i32, %c0_i32_0 : i32, i32, i32
  }
  func.func @transform_1(%arg0: i32) -> (i32, i32, i32) {
    %c0_i32 = arith.constant 0 : i32
    %c0_i32_0 = arith.constant 0 : i32
    %c0_i32_1 = arith.constant 0 : i32
    %c0_i32_2 = arith.constant 0 : i32
    return %c0_i32, %c0_i32_0, %c0_i32_1 : i32, i32, i32
  }
  func.func @transform_2(%arg0: i32) -> (i32, i32) {
    %c0_i32 = arith.constant 0 : i32
    %c0_i32_0 = arith.constant 0 : i32
    %c0_i32_1 = arith.constant 0 : i32
    return %c0_i32, %c0_i32_0 : i32, i32
  }
  func.func @transform_3(%arg0: i32) -> (i32, i32, i32) {
    %c0_i32 = arith.constant 0 : i32
    %c0_i32_0 = arith.constant 0 : i32
    %c0_i32_1 = arith.constant 0 : i32
    %c0_i32_2 = arith.constant 0 : i32
    return %c0_i32, %c0_i32_0, %c0_i32_1 : i32, i32, i32
  }
  func.func @transform_4(%arg0: i32) -> (i32, i32) {
    %c0_i32 = arith.constant 0 : i32
    %c0_i32_0 = arith.constant 0 : i32
    %c0_i32_1 = arith.constant 0 : i32
    return %c0_i32, %c0_i32_0 : i32, i32
  }
  func.func @transform_5(%arg0: i32) -> (i32, i32, i32) {
    %c0_i32 = arith.constant 0 : i32
    %c0_i32_0 = arith.constant 0 : i32
    %c0_i32_1 = arith.constant 0 : i32
    %c0_i32_2 = arith.constant 0 : i32
    return %c0_i32, %c0_i32_0, %c0_i32_1 : i32, i32, i32
  }
  func.func @transform_6(%arg0: i32) -> (i32, i32) {
    %c0_i32 = arith.constant 0 : i32
    %c0_i32_0 = arith.constant 0 : i32
    %c0_i32_1 = arith.constant 0 : i32
    return %c0_i32, %c0_i32_0 : i32, i32
  }
  func.func @transform_7(%arg0: i32) -> (i32, i32) {
    %c0_i32 = arith.constant 0 : i32
    %c0_i32_0 = arith.constant 0 : i32
    %c0_i32_1 = arith.constant 0 : i32
    return %c0_i32, %c0_i32_0 : i32, i32
  }
  func.func @transform_8(%arg0: i32) -> (i32, i32) {
    %c0_i32 = arith.constant 0 : i32
    %c0_i32_0 = arith.constant 0 : i32
    %c0_i32_1 = arith.constant 0 : i32
    return %c0_i32, %c0_i32_0 : i32, i32
  }
  func.func @transform_9(%arg0: i32) -> (i32, i32, i32) {
    %c0_i32 = arith.constant 0 : i32
    %c0_i32_0 = arith.constant 0 : i32
    %c0_i32_1 = arith.constant 0 : i32
    return %arg0, %c0_i32, %c0_i32_0 : i32, i32, i32
  }
}

</mosaic_0001>

<llo_original>
// kernel: mnist_convnet_forward.1
$region0: #{mnist_convnet_forward.1}
  #allocation0 [shape = 'u32[]', space=smem, size = 0x4, offset = 0x4, fixed_abs, tag = 'smem constant byte address 0x4 - core index']
  #allocation1 [shape = 'u32[144,128]{1,0:T(1,128)}', space=vmem, size = 0x12000, scoped, tag = 'internal scratch']
  %s0 = inlined_call_operand.vmem [shape: f32[8,28,32], index: 0, kind: input, shape index: {}]
  %s1 = inlined_call_operand.vmem [shape: f32[5,32,256], index: 1, kind: input, shape index: {}]
  %s2 = inlined_call_operand.vmem [shape: f32[1,128], index: 2, kind: input, shape index: {}]
  %s3 = inlined_call_operand.hbm [shape: f32[5,128,256], index: 3, kind: input, shape index: {}]
  %s4 = inlined_call_operand.vmem [shape: f32[1,128], index: 4, kind: input, shape index: {}]
  %s5 = inlined_call_operand.vmem [shape: f32[4,128,128], index: 5, kind: input, shape index: {}]
  %s6 = inlined_call_operand.vmem [shape: f32[1,128], index: 6, kind: input, shape index: {}]
  %s7 = inlined_call_operand.vmem [shape: f32[128,128], index: 7, kind: input, shape index: {}]
  %s8 = inlined_call_operand.vmem [shape: f32[1,128], index: 8, kind: input, shape index: {}]
  %s9 = inlined_call_operand.hbm [shape: f32[8,1,128], index: 9, kind: output, shape index: {}]
  %s10 = sld [smem:[#allocation0]]
  $region73: #{mnist_convnet_forward.1} parent=0
    _
  %s12 = ssub.s32 1, %s10
  %s13 = scalar_select 0, %s12, %s10
  $region1: #{mnist_convnet_forward.1} parent=0
    #allocation2 [shape = 'u8[655360]{0}', space=vmem, size = 0xa0000, scoped, tag = 'input window, operand 3, single buffered']
    #allocation3 [shape = 's32[2]{0}', space=sflag, size = 0x8, scoped, tag = 'scoped memory for mnist_convnet_forward.1']
    #allocation4 [shape = 's32[2]{0}', space=sflag, size = 0x8, scoped, tag = 'scoped memory for mnist_convnet_forward.1']
    #allocation5 [shape = 'u8[2048]{0}', space=vmem, size = 0x800, scoped, tag = 'output window, operand 0']
    %14 = vsyncpa [#allocation3], 0
    %15 = vsyncpa [#allocation4], 0
    %s16 = scalar_lea.sflag [#allocation4], 1
    %17 = vsyncpa %s16, 0
    loop: start=0, step=1, limit=6
    $region2: #{mnist_convnet_forward.1} parent=1 // loop_pre_header
      _
    $region3: #{mnist_convnet_forward.1} parent=1 // loop_header
      %s19 = sphi 0, %s23
      %p20 = scmp.ge.s32.totalorder %s19, 6
      %s29 = sphi 0, %s31
      %s32 = sphi 0, %s29
      %s33 = sphi 0, %s32
      %s49 = sphi 0, %s33
      %s53 = sphi 0, %s53
      %s55 = sphi 0, %s53
      %s56 = sphi 0, %s55
      %s70 = sphi 0, %s56
      %s74 = sphi 0, %s74
      %s76 = sphi 0, %s74
      %s77 = sphi 0, %s76
      %s91 = sphi 0, %s77
      %s95 = sphi 0, %s95
      %s97 = sphi 0, %s95
      %s98 = sphi 0, %s97
      %s112 = sphi 0, %s98
      %s116 = sphi 0, %s116
      %s118 = sphi 0, %s116
      %s119 = sphi 0, %s118
      %s133 = sphi 0, %s119
      %s137 = sphi 0, %s137
      %s139 = sphi 0, %s137
      %s140 = sphi 0, %s139
      %s154 = sphi 0, %s140
      %s158 = sphi 0, %s158
      %s160 = sphi 0, %s158
      %s161 = sphi 0, %s160
      %s175 = sphi 0, %s161
      %s179 = sphi 0, %s179
      %s181 = sphi 0, %s179
      %s182 = sphi 0, %s181
      %s196 = sphi 0, %s182
      %s200 = sphi 0, %s200
      %s202 = sphi 0, %s200
      %s203 = sphi 0, %s202
      %s217 = sphi 0, %s203
      %s223 = sphi 0, %s225
      %s226 = sphi 0, %s223
      %s227 = sphi 0, %s226
      %s243 = sphi 0, %s227
    $region4: #{mnist_convnet_forward.1} parent=1 // loop_header_branch
      %22 = sbr.rel (%p20) target = $region8
    $region5: #{mnist_convnet_forward.1} parent=1 // loop_body
      %s24 = ssub.s32 %s19, 1
      %s25 = ssub.s32 %s19, 2
      %s26 = sadd.s32 %s19, 1
      %s27 = ssub.s32 %s19, %s26
      %p28 = scmp.eq.s32.totalorder %s27, 0
      %s30 = sadd.s32 %s29, 1
      %s31 = scalar_select %p28, %s29, %s30
      %p34 = pneg %p28
      %p35 = scmp.eq.s32.totalorder %s19, 3
      %p36 = por %p34, %p35
      %p37 = scmp.ne.s32.totalorder %s29, %s32
      %p38 = scmp.eq.s32.totalorder %s19, 0
      %p39 = por %p37, %p38
      %p40 = scmp.ne.s32.totalorder %s29, %s32
      %p41 = scmp.eq.s32.totalorder %s24, 3
      %p42 = por %p40, %p41
      %p43 = scmp.ne.s32.totalorder %s32, %s33
      %p44 = scmp.eq.s32.totalorder %s24, 0
      %p45 = por %p43, %p44
      %p46 = scmp.ne.s32.totalorder %s32, %s33
      %p47 = scmp.eq.s32.totalorder %s25, 3
      %p48 = por %p46, %p47
      %p50 = scmp.ne.s32.totalorder %s33, %s49
      %p51 = scmp.eq.s32.totalorder %s25, 0
      %p52 = por %p50, %p51
      %s54 = sadd.s32 %s53, 1
      %p57 = scmp.eq.s32.totalorder %s19, 3
      %p58 = scmp.ne.s32.totalorder %s53, %s55
      %p59 = scmp.eq.s32.totalorder %s19, 0
      %p60 = por %p58, %p59
      %p61 = scmp.ne.s32.totalorder %s53, %s55
      %p62 = scmp.eq.s32.totalorder %s24, 3
      %p63 = por %p61, %p62
      %p64 = scmp.ne.s32.totalorder %s55, %s56
      %p65 = scmp.eq.s32.totalorder %s24, 0
      %p66 = por %p64, %p65
      %p67 = scmp.ne.s32.totalorder %s55, %s56
      %p68 = scmp.eq.s32.totalorder %s25, 3
      %p69 = por %p67, %p68
      %p71 = scmp.ne.s32.totalorder %s56, %s70
      %p72 = scmp.eq.s32.totalorder %s25, 0
      %p73 = por %p71, %p72
      %s75 = sadd.s32 %s74, 1
      %p78 = scmp.eq.s32.totalorder %s19, 3
      %p79 = scmp.ne.s32.totalorder %s74, %s76
      %p80 = scmp.eq.s32.totalorder %s19, 0
      %p81 = por %p79, %p80
      %p82 = scmp.ne.s32.totalorder %s74, %s76
      %p83 = scmp.eq.s32.totalorder %s24, 3
      %p84 = por %p82, %p83
      %p85 = scmp.ne.s32.totalorder %s76, %s77
      %p86 = scmp.eq.s32.totalorder %s24, 0
      %p87 = por %p85, %p86
      %p88 = scmp.ne.s32.totalorder %s76, %s77
      %p89 = scmp.eq.s32.totalorder %s25, 3
      %p90 = por %p88, %p89
      %p92 = scmp.ne.s32.totalorder %s77, %s91
      %p93 = scmp.eq.s32.totalorder %s25, 0
      %p94 = por %p92, %p93
      %s96 = sadd.s32 %s95, 1
      %p99 = scmp.eq.s32.totalorder %s19, 3
      %p100 = scmp.ne.s32.totalorder %s95, %s97
      %p101 = scmp.eq.s32.totalorder %s19, 0
      %p102 = por %p100, %p101
      %p103 = scmp.ne.s32.totalorder %s95, %s97
      %p104 = scmp.eq.s32.totalorder %s24, 3
      %p105 = por %p103, %p104
      %p106 = scmp.ne.s32.totalorder %s97, %s98
      %p107 = scmp.eq.s32.totalorder %s24, 0
      %p108 = por %p106, %p107
      %p109 = scmp.ne.s32.totalorder %s97, %s98
      %p110 = scmp.eq.s32.totalorder %s25, 3
      %p111 = por %p109, %p110
      %p113 = scmp.ne.s32.totalorder %s98, %s112
      %p114 = scmp.eq.s32.totalorder %s25, 0
      %p115 = por %p113, %p114
      %s117 = sadd.s32 %s116, 1
      %p120 = scmp.eq.s32.totalorder %s19, 3
      %p121 = scmp.ne.s32.totalorder %s116, %s118
      %p122 = scmp.eq.s32.totalorder %s19, 0
      %p123 = por %p121, %p122
      %p124 = scmp.ne.s32.totalorder %s116, %s118
      %p125 = scmp.eq.s32.totalorder %s24, 3
      %p126 = por %p124, %p125
      %p127 = scmp.ne.s32.totalorder %s118, %s119
      %p128 = scmp.eq.s32.totalorder %s24, 0
      %p129 = por %p127, %p128
      %p130 = scmp.ne.s32.totalorder %s118, %s119
      %p131 = scmp.eq.s32.totalorder %s25, 3
      %p132 = por %p130, %p131
      %p134 = scmp.ne.s32.totalorder %s119, %s133
      %p135 = scmp.eq.s32.totalorder %s25, 0
      %p136 = por %p134, %p135
      %s138 = sadd.s32 %s137, 1
      %p141 = scmp.eq.s32.totalorder %s19, 3
      %p142 = scmp.ne.s32.totalorder %s137, %s139
      %p143 = scmp.eq.s32.totalorder %s19, 0
      %p144 = por %p142, %p143
      %p145 = scmp.ne.s32.totalorder %s137, %s139
      %p146 = scmp.eq.s32.totalorder %s24, 3
      %p147 = por %p145, %p146
      %p148 = scmp.ne.s32.totalorder %s139, %s140
      %p149 = scmp.eq.s32.totalorder %s24, 0
      %p150 = por %p148, %p149
      %p151 = scmp.ne.s32.totalorder %s139, %s140
      %p152 = scmp.eq.s32.totalorder %s25, 3
      %p153 = por %p151, %p152
      %p155 = scmp.ne.s32.totalorder %s140, %s154
      %p156 = scmp.eq.s32.totalorder %s25, 0
      %p157 = por %p155, %p156
      %s159 = sadd.s32 %s158, 1
      %p162 = scmp.eq.s32.totalorder %s19, 3
      %p163 = scmp.ne.s32.totalorder %s158, %s160
      %p164 = scmp.eq.s32.totalorder %s19, 0
      %p165 = por %p163, %p164
      %p166 = scmp.ne.s32.totalorder %s158, %s160
      %p167 = scmp.eq.s32.totalorder %s24, 3
      %p168 = por %p166, %p167
      %p169 = scmp.ne.s32.totalorder %s160, %s161
      %p170 = scmp.eq.s32.totalorder %s24, 0
      %p171 = por %p169, %p170
      %p172 = scmp.ne.s32.totalorder %s160, %s161
      %p173 = scmp.eq.s32.totalorder %s25, 3
      %p174 = por %p172, %p173
      %p176 = scmp.ne.s32.totalorder %s161, %s175
      %p177 = scmp.eq.s32.totalorder %s25, 0
      %p178 = por %p176, %p177
      %s180 = sadd.s32 %s179, 1
      %p183 = scmp.eq.s32.totalorder %s19, 3
      %p184 = scmp.ne.s32.totalorder %s179, %s181
      %p185 = scmp.eq.s32.totalorder %s19, 0
      %p186 = por %p184, %p185
      %p187 = scmp.ne.s32.totalorder %s179, %s181
      %p188 = scmp.eq.s32.totalorder %s24, 3
      %p189 = por %p187, %p188
      %p190 = scmp.ne.s32.totalorder %s181, %s182
      %p191 = scmp.eq.s32.totalorder %s24, 0
      %p192 = por %p190, %p191
      %p193 = scmp.ne.s32.totalorder %s181, %s182
      %p194 = scmp.eq.s32.totalorder %s25, 3
      %p195 = por %p193, %p194
      %p197 = scmp.ne.s32.totalorder %s182, %s196
      %p198 = scmp.eq.s32.totalorder %s25, 0
      %p199 = por %p197, %p198
      %s201 = sadd.s32 %s200, 1
      %p204 = scmp.eq.s32.totalorder %s19, 3
      %p205 = scmp.ne.s32.totalorder %s200, %s202
      %p206 = scmp.eq.s32.totalorder %s19, 0
      %p207 = por %p205, %p206
      %p208 = scmp.ne.s32.totalorder %s200, %s202
      %p209 = scmp.eq.s32.totalorder %s24, 3
      %p210 = por %p208, %p209
      %p211 = scmp.ne.s32.totalorder %s202, %s203
      %p212 = scmp.eq.s32.totalorder %s24, 0
      %p213 = por %p211, %p212
      %p214 = scmp.ne.s32.totalorder %s202, %s203
      %p215 = scmp.eq.s32.totalorder %s25, 3
      %p216 = por %p214, %p215
      %p218 = scmp.ne.s32.totalorder %s203, %s217
      %p219 = scmp.eq.s32.totalorder %s25, 0
      %p220 = por %p218, %p219
      %s221 = ssub.s32 %s19, %s26
      %p222 = scmp.eq.s32.totalorder %s221, 0
      %s224 = sadd.s32 %s223, 1
      %s225 = scalar_select %p222, %s223, %s224
      %p228 = pneg %p222
      %p229 = scmp.eq.s32.totalorder %s19, 3
      %p230 = por %p228, %p229
      %p231 = scmp.ne.s32.totalorder %s223, %s226
      %p232 = scmp.eq.s32.totalorder %s19, 0
      %p233 = por %p231, %p232
      %p234 = scmp.ne.s32.totalorder %s223, %s226
      %p235 = scmp.eq.s32.totalorder %s24, 3
      %p236 = por %p234, %p235
      %p237 = scmp.ne.s32.totalorder %s226, %s227
      %p238 = scmp.eq.s32.totalorder %s24, 0
      %p239 = por %p237, %p238
      %p240 = scmp.ne.s32.totalorder %s226, %s227
      %p241 = scmp.eq.s32.totalorder %s25, 3
      %p242 = por %p240, %p241
      %p244 = scmp.ne.s32.totalorder %s227, %s243
      %p245 = scmp.eq.s32.totalorder %s25, 0
      %p246 = por %p244, %p245
      %p247 = scmp.le.s32.totalorder 1, %s19
      %p248 = scmp.lt.s32.totalorder %s19, 5
      %p249 = pnand %p247, %p248
      %p250 = pneg %p249
      // Predicated region
      $region9: #{mnist_convnet_forward.1} parent=5 // pred_check
        _
      $region10: #{mnist_convnet_forward.1} parent=5 // pred_check_branch
        %252 = sbr.rel (%p249) target = $region12
      $region11: #{mnist_convnet_forward.1} parent=5 // pred_region
        %s253 = ssub.s32 %s19, 1
        // Predicated region
        $region13: #{mnist_convnet_forward.1} parent=11 // pred_check
          %p254 = pneg %p66
        $region14: #{mnist_convnet_forward.1} parent=11 // pred_check_branch
          %256 = sbr.rel (%p254) target = $region16
        $region15: #{mnist_convnet_forward.1} parent=11 // pred_region
          _
        $region16: #{mnist_convnet_forward.1} parent=11 // pred_fallthru
          _
        // Predicated region
        $region17: #{mnist_convnet_forward.1} parent=11 // pred_check
          %p257 = pneg %p87
        $region18: #{mnist_convnet_forward.1} parent=11 // pred_check_branch
          %259 = sbr.rel (%p257) target = $region20
        $region19: #{mnist_convnet_forward.1} parent=11 // pred_region
          _
        $region20: #{mnist_convnet_forward.1} parent=11 // pred_fallthru
          _
        // Predicated region
        $region21: #{mnist_convnet_forward.1} parent=11 // pred_check
          %p260 = pneg %p108
        $region22: #{mnist_convnet_forward.1} parent=11 // pred_check_branch
          %262 = sbr.rel (%p260) target = $region24
        $region23: #{mnist_convnet_forward.1} parent=11 // pred_region
          %s264 = ssub.s32 20480, 20480
          %265 = vsyncadd [#allocation3], %s264
          %s266 = sshll.u32 [#allocation2], 4
          %s267 = int_to_ptr.vmem [resolvable:$true] %s266
          %272 = dma.hbm_to_vmem [thread:$0]  %s3, 20480, %s267, [#allocation3], 256, 256, 16
        $region24: #{mnist_convnet_forward.1} parent=11 // pred_fallthru
          _
        // Predicated region
        $region25: #{mnist_convnet_forward.1} parent=11 // pred_check
          %p273 = pneg %p129
        $region26: #{mnist_convnet_forward.1} parent=11 // pred_check_branch
          %275 = sbr.rel (%p273) target = $region28
        $region27: #{mnist_convnet_forward.1} parent=11 // pred_region
          _
        $region28: #{mnist_convnet_forward.1} parent=11 // pred_fallthru
          _
        // Predicated region
        $region29: #{mnist_convnet_forward.1} parent=11 // pred_check
          %p276 = pneg %p150
        $region30: #{mnist_convnet_forward.1} parent=11 // pred_check_branch
          %278 = sbr.rel (%p276) target = $region32
        $region31: #{mnist_convnet_forward.1} parent=11 // pred_region
          _
        $region32: #{mnist_convnet_forward.1} parent=11 // pred_fallthru
          _
        // Predicated region
        $region33: #{mnist_convnet_forward.1} parent=11 // pred_check
          %p279 = pneg %p171
        $region34: #{mnist_convnet_forward.1} parent=11 // pred_check_branch
          %281 = sbr.rel (%p279) target = $region36
        $region35: #{mnist_convnet_forward.1} parent=11 // pred_region
          _
        $region36: #{mnist_convnet_forward.1} parent=11 // pred_fallthru
          _
        // Predicated region
        $region37: #{mnist_convnet_forward.1} parent=11 // pred_check
          %p282 = pneg %p192
        $region38: #{mnist_convnet_forward.1} parent=11 // pred_check_branch
          %284 = sbr.rel (%p282) target = $region40
        $region39: #{mnist_convnet_forward.1} parent=11 // pred_region
          _
        $region40: #{mnist_convnet_forward.1} parent=11 // pred_fallthru
          _
        // Predicated region
        $region41: #{mnist_convnet_forward.1} parent=11 // pred_check
          %p285 = pneg %p213
        $region42: #{mnist_convnet_forward.1} parent=11 // pred_check_branch
          %287 = sbr.rel (%p285) target = $region44
        $region43: #{mnist_convnet_forward.1} parent=11 // pred_region
          _
        $region44: #{mnist_convnet_forward.1} parent=11 // pred_fallthru
          _
      $region12: #{mnist_convnet_forward.1} parent=5 // pred_fallthru
        _
      %p288 = scmp.lt.s32.totalorder %s19, 4
      // Predicated region
      $region45: #{mnist_convnet_forward.1} parent=5 // pred_check
        %p289 = pneg %p288
      $region46: #{mnist_convnet_forward.1} parent=5 // pred_check_branch
        %291 = sbr.rel (%p289) target = $region48
      $region47: #{mnist_convnet_forward.1} parent=5 // pred_region
        // Predicated region
        $region49: #{mnist_convnet_forward.1} parent=47 // pred_check
          %p292 = pneg %p39
        $region50: #{mnist_convnet_forward.1} parent=47 // pred_check_branch
          %294 = sbr.rel (%p292) target = $region52
        $region51: #{mnist_convnet_forward.1} parent=47 // pred_region
          %s295 = smul.u32 2, %s19
          %p296 = scmp.lt.s32.totalorder %s295, 7
          %s297 = scalar_select %p296, %s295, 7
          %s298 = smul.addr %s297, 4
          %s299 = smul.addr %s298, 8
          %s300 = scalar_lea.vmem %s0, %s299
          %s301 = smul.u32 2, %s19
        $region52: #{mnist_convnet_forward.1} parent=47 // pred_fallthru
          _
      $region48: #{mnist_convnet_forward.1} parent=5 // pred_fallthru
        _
      %p302 = scmp.le.s32.totalorder 1, %s19
      %p303 = scmp.lt.s32.totalorder %s19, 5
      %p304 = pnand %p302, %p303
      %p305 = pneg %p304
      // Predicated region
      $region53: #{mnist_convnet_forward.1} parent=5 // pred_check
        _
      $region54: #{mnist_convnet_forward.1} parent=5 // pred_check_branch
        %307 = sbr.rel (%p304) target = $region56
      $region55: #{mnist_convnet_forward.1} parent=5 // pred_region
        %s308 = ssub.s32 %s19, 1
        // Predicated region
        $region57: #{mnist_convnet_forward.1} parent=55 // pred_check
          %p309 = pneg %p108
        $region58: #{mnist_convnet_forward.1} parent=55 // pred_check_branch
          %311 = sbr.rel (%p309) target = $region60
        $region59: #{mnist_convnet_forward.1} parent=55 // pred_region
          %312 = dma.done [#allocation3], 20480
        $region60: #{mnist_convnet_forward.1} parent=55 // pred_fallthru
          _
        %s313 = smul.u32 2, %s24
        %p314 = scmp.lt.s32.totalorder %s313, 7
        %s315 = scalar_select %p314, %s313, 7
        %s316 = smul.addr %s315, 4
        %s317 = smul.addr %s316, 8
        %s318 = scalar_lea.vmem %s0, %s317
        %p319 = pneg %p45
        %p320 = pneg %p42
        %p321 = pneg %p66
        %p322 = pneg %p63
        %p323 = pneg %p87
        %p324 = pneg %p84
        %p325 = pneg %p108
        %p326 = pneg %p105
        %p327 = pneg %p129
        %p328 = pneg %p126
        %p329 = pneg %p150
        %p330 = pneg %p147
        %p331 = pneg %p171
        %p332 = pneg %p168
        %p333 = pneg %p192
        %p334 = pneg %p189
        %p335 = pneg %p213
        %p336 = pneg %p210
        %p337 = pneg %p239
        %p338 = pneg %p236
        %s339 = sand.u32 %s226, 1
        %s340 = scalar_lea.sflag [#allocation4], %s339
        %s341 = sand.u32 %s226, 1
        %s342 = smul.addr %s341, 2
        %s343 = scalar_lea.vmem [#allocation5], %s342
        %s344 = smul.u32 2, %s24
        %p345 = scmp.lt.s32.totalorder %s344, 7
        %s346 = scalar_select %p345, %s344, 7
        %s347 = smul.addr %s346, 4
        %s348 = smul.addr %s347, 8
        %s349 = scalar_lea.vmem %s0, %s348
        %s350 = smul.u32 2, %s24
        %s351 = smul.u32 2, %s24
        %v352 = vld [vmem:[%s349] sm:$0xff]
        %v353 = vld [vmem:[%s349 + $0x8] sm:$0xff]
        %v354 = vld [vmem:[%s349 + $0x10] sm:$0xff]
        %v355 = vld [vmem:[%s349 + $0x20] sm:$0xff]
        %v356 = vld [vmem:[%s349 + $0x28] sm:$0xff]
        %v357 = vld [vmem:[%s349 + $0x30] sm:$0xff]
        %v358 = vld [vmem:[%s1] sm:$0xff]
        %v359 = vld [vmem:[%s1 + $0x8] sm:$0xff]
        %v360 = vld [vmem:[%s1 + $0x10] sm:$0xff]
        %v361 = vld [vmem:[%s1 + $0x18] sm:$0xff]
        %v362 = vld [vmem:[%s1 + $0x20] sm:$0xff]
        %v363 = vld [vmem:[%s1 + $0x28] sm:$0xff]
        %v364 = vld [vmem:[%s1 + $0x30] sm:$0xff]
        %v365 = vld [vmem:[%s1 + $0x38] sm:$0xff]
        %v366 = vld [vmem:[%s349 + $0x1] sm:$0xff]
        %v367 = vld [vmem:[%s349 + $0x9] sm:$0xff]
        %v368 = vld [vmem:[%s349 + $0x11] sm:$0xff]
        %v369 = vld [vmem:[%s349 + $0x21] sm:$0xff]
        %v370 = vld [vmem:[%s349 + $0x29] sm:$0xff]
        %v371 = vld [vmem:[%s349 + $0x31] sm:$0xff]
        %s372 = scalar_lea.vmem %s1, 64
        %v373 = vld [vmem:[%s372] sm:$0xff]
        %v374 = vld [vmem:[%s372 + $0x8] sm:$0xff]
        %v375 = vld [vmem:[%s372 + $0x10] sm:$0xff]
        %v376 = vld [vmem:[%s372 + $0x18] sm:$0xff]
        %v377 = vld [vmem:[%s372 + $0x20] sm:$0xff]
        %v378 = vld [vmem:[%s372 + $0x28] sm:$0xff]
        %v379 = vld [vmem:[%s372 + $0x30] sm:$0xff]
        %v380 = vld [vmem:[%s372 + $0x38] sm:$0xff]
        %vm381 = vcmask 261120
        %v383 = vsel %vm381, %v366, 0
        %v386 = vsel %vm381, %v367, 0
        %v389 = vsel %vm381, %v368, 0
        %v392 = vsel %vm381, %v369, 0
        %v395 = vsel %vm381, %v370, 0
        %v398 = vsel %vm381, %v371, 0
        %400 = vmatprep.subr.mxu0 %v374
        %401 = vmatpush1.msra.mxu0 %v373
        %402 = vmatprep.subr.mxu0 %v376
        %403 = vmatpush1.msra.mxu0 %v375
        %404 = vmatprep.subr.mxu0 %v378
        %405 = vmatpush1.msra.mxu0 %v377
        %406 = vmatprep.subr.mxu0 %v380
        %407 = vmatpush1.msra.mxu0 %v379
        %408 = vmatprep.subr.mxu0 0.0
        %409 = vmatpush1.msra.mxu0 0.0
        %410 = vmatprep.subr.mxu0 0.0
        %411 = vmatpush1.msra.mxu0 0.0
        %412 = vmatprep.subr.mxu0 0.0
        %413 = vmatpush1.msra.mxu0 0.0
        %414 = vmatprep.subr.mxu0 0.0
        %415 = vmatpush1.msra.mxu0 0.0
        %416 = vmatprep.subr.mxu0 0.0
        %417 = vmatpush1.msra.mxu0 0.0
        %418 = vmatprep.subr.mxu0 0.0
        %419 = vmatpush1.msra.mxu0 0.0
        %420 = vmatprep.subr.mxu0 0.0
        %421 = vmatpush1.msra.mxu0 0.0
        %422 = vmatprep.subr.mxu0 0.0
        %423 = vmatpush1.msra.mxu0 0.0
        %424 = vmatprep.subr.mxu0 0.0
        %425 = vmatpush1.msra.mxu0 0.0
        %426 = vmatprep.subr.mxu0 0.0
        %427 = vmatpush1.msra.mxu0 0.0
        %428 = vmatprep.subr.mxu0 0.0
        %429 = vmatpush1.msra.mxu0 0.0
        %430 = vmatprep.subr.mxu0 0.0
        %431 = vmatpush1.msra.mxu0 0.0
        %432 = vmatprep.subr.mxu0 0.0
        %433 = vmatpush1.msra.mxu0 0.0
        %434 = vmatprep.subr.mxu0 0.0
        %435 = vmatpush1.msra.mxu0 0.0
        %436 = vmatprep.subr.mxu0 0.0
        %437 = vmatpush1.msra.mxu0 0.0
        %438 = vmatprep.subr.mxu0 0.0
        %439 = vmatpush1.msra.mxu0 0.0
        %440 = vmatprep.subr.mxu0 0.0
        %441 = vmatpush1.msra.mxu0 0.0
        %442 = vmatprep.subr.mxu0 0.0
        %443 = vmatpush1.msra.mxu0 0.0
        %444 = vmatprep.subr.mxu0 0.0
        %445 = vmatpush1.msra.mxu0 0.0
        %446 = vmatprep.subr.mxu0 0.0
        %447 = vmatpush1.msra.mxu0 0.0
        %448 = vmatprep.subr.mxu0 0.0
        %449 = vmatpush1.msra.mxu0 0.0
        %450 = vmatprep.subr.mxu0 0.0
        %451 = vmatpush1.msra.mxu0 0.0
        %452 = vmatprep.subr.mxu0 0.0
        %453 = vmatpush1.msra.mxu0 0.0
        %454 = vmatprep.subr.mxu0 0.0
        %455 = vmatpush1.msra.mxu0 0.0
        %456 = vmatprep.subr.mxu0 0.0
        %457 = vmatpush1.msra.mxu0 0.0
        %458 = vmatprep.subr.mxu0 0.0
        %459 = vmatpush1.msra.mxu0 0.0
        %460 = vmatprep.subr.mxu0 0.0
        %461 = vmatpush1.msra.mxu0 0.0
        %462 = vmatprep.subr.mxu0 0.0
        %463 = vmatpush1.msra.mxu0 0.0
        %464 = vmatprep.mubr.f32.mxu0 0.0
        %465 = vmatmul.mubr.f32.gmra.mrb[0].mxu0 %v383
        %v466 = vpop.f32.mrb[0].mxu0
        %v467 = vadd.f32 0.0, %v466
        %v468 = vpop.f32.mrb[0].mxu0
        %v469 = vadd.f32 0.0, %v468
        %470 = vmatprep.mubr.f32.mxu0 0.0
        %471 = vmatmul.mubr.f32.gmra.mrb[0].mxu0 %v386
        %v472 = vpop.f32.mrb[0].mxu0
        %v473 = vadd.f32 0.0, %v472
        %v474 = vpop.f32.mrb[0].mxu0
        %v475 = vadd.f32 0.0, %v474
        %476 = vmatprep.mubr.f32.mxu0 0.0
        %477 = vmatmul.mubr.f32.gmra.mrb[0].mxu0 %v389
        %v478 = vpop.f32.mrb[0].mxu0
        %v479 = vadd.f32 0.0, %v478
        %v480 = vpop.f32.mrb[0].mxu0
        %v481 = vadd.f32 0.0, %v480
        %482 = vmatprep.mubr.f32.mxu0 0.0
        %483 = vmatmul.mubr.f32.gmra.mrb[0].mxu0 %v392
        %v484 = vpop.f32.mrb[0].mxu0
        %v485 = vadd.f32 0.0, %v484
        %v486 = vpop.f32.mrb[0].mxu0
        %v487 = vadd.f32 0.0, %v486
        %488 = vmatprep.mubr.f32.mxu0 0.0
        %489 = vmatmul.mubr.f32.gmra.mrb[0].mxu0 %v395
        %v490 = vpop.f32.mrb[0].mxu0
        %v491 = vadd.f32 0.0, %v490
        %v492 = vpop.f32.mrb[0].mxu0
        %v493 = vadd.f32 0.0, %v492
        %494 = vmatprep.mubr.f32.mxu0 0.0
        %495 = vmatmul.mubr.f32.gmra.mrb[0].mxu0 %v398
        %v496 = vpop.f32.mrb[0].mxu0
        %v497 = vadd.f32 0.0, %v496
        %v498 = vpop.f32.mrb[0].mxu0
        %v499 = vadd.f32 0.0, %v498
        %500 = vdwg.mxu0
        %v502 = vsel %vm381, %v352, 0
        %v505 = vsel %vm381, %v353, 0
        %v508 = vsel %vm381, %v354, 0
        %v511 = vsel %vm381, %v355, 0
        %v514 = vsel %vm381, %v356, 0
        %v517 = vsel %vm381, %v357, 0
        %519 = vmatprep.subr.mxu0 %v359
        %520 = vmatpush1.msra.mxu0 %v358
        %521 = vmatprep.subr.mxu0 %v361
        %522 = vmatpush1.msra.mxu0 %v360
        %523 = vmatprep.subr.mxu0 %v363
        %524 = vmatpush1.msra.mxu0 %v362
        %525 = vmatprep.subr.mxu0 %v365
        %526 = vmatpush1.msra.mxu0 %v364
        %527 = vmatprep.subr.mxu0 0.0
        %528 = vmatpush1.msra.mxu0 0.0
        %529 = vmatprep.subr.mxu0 0.0
        %530 = vmatpush1.msra.mxu0 0.0
        %531 = vmatprep.subr.mxu0 0.0
        %532 = vmatpush1.msra.mxu0 0.0
        %533 = vmatprep.subr.mxu0 0.0
        %534 = vmatpush1.msra.mxu0 0.0
        %535 = vmatprep.subr.mxu0 0.0
        %536 = vmatpush1.msra.mxu0 0.0
        %537 = vmatprep.subr.mxu0 0.0
        %538 = vmatpush1.msra.mxu0 0.0
        %539 = vmatprep.subr.mxu0 0.0
        %540 = vmatpush1.msra.mxu0 0.0
        %541 = vmatprep.subr.mxu0 0.0
        %542 = vmatpush1.msra.mxu0 0.0
        %543 = vmatprep.subr.mxu0 0.0
        %544 = vmatpush1.msra.mxu0 0.0
        %545 = vmatprep.subr.mxu0 0.0
        %546 = vmatpush1.msra.mxu0 0.0
        %547 = vmatprep.subr.mxu0 0.0
        %548 = vmatpush1.msra.mxu0 0.0
        %549 = vmatprep.subr.mxu0 0.0
        %550 = vmatpush1.msra.mxu0 0.0
        %551 = vmatprep.subr.mxu0 0.0
        %552 = vmatpush1.msra.mxu0 0.0
        %553 = vmatprep.subr.mxu0 0.0
        %554 = vmatpush1.msra.mxu0 0.0
        %555 = vmatprep.subr.mxu0 0.0
        %556 = vmatpush1.msra.mxu0 0.0
        %557 = vmatprep.subr.mxu0 0.0
        %558 = vmatpush1.msra.mxu0 0.0
        %559 = vmatprep.subr.mxu0 0.0
        %560 = vmatpush1.msra.mxu0 0.0
        %561 = vmatprep.subr.mxu0 0.0
        %562 = vmatpush1.msra.mxu0 0.0
        %563 = vmatprep.subr.mxu0 0.0
        %564 = vmatpush1.msra.mxu0 0.0
        %565 = vmatprep.subr.mxu0 0.0
        %566 = vmatpush1.msra.mxu0 0.0
        %567 = vmatprep.subr.mxu0 0.0
        %568 = vmatpush1.msra.mxu0 0.0
        %569 = vmatprep.subr.mxu0 0.0
        %570 = vmatpush1.msra.mxu0 0.0
        %571 = vmatprep.subr.mxu0 0.0
        %572 = vmatpush1.msra.mxu0 0.0
        %573 = vmatprep.subr.mxu0 0.0
        %574 = vmatpush1.msra.mxu0 0.0
        %575 = vmatprep.subr.mxu0 0.0
        %576 = vmatpush1.msra.mxu0 0.0
        %577 = vmatprep.subr.mxu0 0.0
        %578 = vmatpush1.msra.mxu0 0.0
        %579 = vmatprep.subr.mxu0 0.0
        %580 = vmatpush1.msra.mxu0 0.0
        %581 = vmatprep.subr.mxu0 0.0
        %582 = vmatpush1.msra.mxu0 0.0
        %583 = vmatprep.mubr.f32.mxu0 0.0
        %584 = vmatmul.mubr.f32.gmra.mrb[0].mxu0 %v502
        %v585 = vpop.f32.mrb[0].mxu0
        %v586 = vadd.f32 %v467, %v585
        %v587 = vpop.f32.mrb[0].mxu0
        %v588 = vadd.f32 %v469, %v587
        %589 = vmatprep.mubr.f32.mxu0 0.0
        %590 = vmatmul.mubr.f32.gmra.mrb[0].mxu0 %v505
        %v591 = vpop.f32.mrb[0].mxu0
        %v592 = vadd.f32 %v473, %v591
        %v593 = vpop.f32.mrb[0].mxu0
        %v594 = vadd.f32 %v475, %v593
        %595 = vmatprep.mubr.f32.mxu0 0.0
        %596 = vmatmul.mubr.f32.gmra.mrb[0].mxu0 %v508
        %v597 = vpop.f32.mrb[0].mxu0
        %v598 = vadd.f32 %v479, %v597
        %v599 = vpop.f32.mrb[0].mxu0
        %v600 = vadd.f32 %v481, %v599
        %601 = vmatprep.mubr.f32.mxu0 0.0
        %602 = vmatmul.mubr.f32.gmra.mrb[0].mxu0 %v511
        %v603 = vpop.f32.mrb[0].mxu0
        %v604 = vadd.f32 %v485, %v603
        %v605 = vpop.f32.mrb[0].mxu0
        %v606 = vadd.f32 %v487, %v605
        %607 = vmatprep.mubr.f32.mxu0 0.0
        %608 = vmatmul.mubr.f32.gmra.mrb[0].mxu0 %v514
        %v609 = vpop.f32.mrb[0].mxu0
        %v610 = vadd.f32 %v491, %v609
        %v611 = vpop.f32.mrb[0].mxu0
        %v612 = vadd.f32 %v493, %v611
        %613 = vmatprep.mubr.f32.mxu0 0.0
        %614 = vmatmul.mubr.f32.gmra.mrb[0].mxu0 %v517
        %v615 = vpop.f32.mrb[0].mxu0
        %v616 = vadd.f32 %v497, %v615
        %v617 = vpop.f32.mrb[0].mxu0
        %v618 = vadd.f32 %v499, %v617
        %619 = vdwg.mxu0
        %v620 = vld [vmem:[%s349 + $0x2] sm:$0xff]
        %v621 = vld [vmem:[%s349 + $0xa] sm:$0xff]
        %v622 = vld [vmem:[%s349 + $0x12] sm:$0xff]
        %v623 = vld [vmem:[%s349 + $0x22] sm:$0xff]
        %v624 = vld [vmem:[%s349 + $0x2a] sm:$0xff]
        %v625 = vld [vmem:[%s349 + $0x32] sm:$0xff]
        %s626 = scalar_lea.vmem %s1, 128
        %v627 = vld [vmem:[%s626] sm:$0xff]
        %v628 = vld [vmem:[%s626 + $0x8] sm:$0xff]
        %v629 = vld [vmem:[%s626 + $0x10] sm:$0xff]
        %v630 = vld [vmem:[%s626 + $0x18] sm:$0xff]
        %v631 = vld [vmem:[%s626 + $0x20] sm:$0xff]
        %v632 = vld [vmem:[%s626 + $0x28] sm:$0xff]
        %v633 = vld [vmem:[%s626 + $0x30] sm:$0xff]
        %v634 = vld [vmem:[%s626 + $0x38] sm:$0xff]
        %v636 = vsel %vm381, %v620, 0
        %v639 = vsel %vm381, %v621, 0
        %v642 = vsel %vm381, %v622, 0
        %v645 = vsel %vm381, %v623, 0
        %v648 = vsel %vm381, %v624, 0
        %v651 = vsel %vm381, %v625, 0
        %653 = vmatprep.subr.mxu0 %v628
        %654 = vmatpush1.msra.mxu0 %v627
        %655 = vmatprep.subr.mxu0 %v630
        %656 = vmatpush1.msra.mxu0 %v629
        %657 = vmatprep.subr.mxu0 %v632
        %658 = vmatpush1.msra.mxu0 %v631
        %659 = vmatprep.subr.mxu0 %v634
        %660 = vmatpush1.msra.mxu0 %v633
        %661 = vmatprep.subr.mxu0 0.0
        %662 = vmatpush1.msra.mxu0 0.0
        %663 = vmatprep.subr.mxu0 0.0
        %664 = vmatpush1.msra.mxu0 0.0
        %665 = vmatprep.subr.mxu0 0.0
        %666 = vmatpush1.msra.mxu0 0.0
        %667 = vmatprep.subr.mxu0 0.0
        %668 = vmatpush1.msra.mxu0 0.0
        %669 = vmatprep.subr.mxu0 0.0
        %670 = vmatpush1.msra.mxu0 0.0
        %671 = vmatprep.subr.mxu0 0.0
        %672 = vmatpush1.msra.mxu0 0.0
        %673 = vmatprep.subr.mxu0 0.0
        %674 = vmatpush1.msra.mxu0 0.0
        %675 = vmatprep.subr.mxu0 0.0
        %676 = vmatpush1.msra.mxu0 0.0
        %677 = vmatprep.subr.mxu0 0.0
        %678 = vmatpush1.msra.mxu0 0.0
        %679 = vmatprep.subr.mxu0 0.0
        %680 = vmatpush1.msra.mxu0 0.0
        %681 = vmatprep.subr.mxu0 0.0
        %682 = vmatpush1.msra.mxu0 0.0
        %683 = vmatprep.subr.mxu0 0.0
        %684 = vmatpush1.msra.mxu0 0.0
        %685 = vmatprep.subr.mxu0 0.0
        %686 = vmatpush1.msra.mxu0 0.0
        %687 = vmatprep.subr.mxu0 0.0
        %688 = vmatpush1.msra.mxu0 0.0
        %689 = vmatprep.subr.mxu0 0.0
        %690 = vmatpush1.msra.mxu0 0.0
        %691 = vmatprep.subr.mxu0 0.0
        %692 = vmatpush1.msra.mxu0 0.0
        %693 = vmatprep.subr.mxu0 0.0
        %694 = vmatpush1.msra.mxu0 0.0
        %695 = vmatprep.subr.mxu0 0.0
        %696 = vmatpush1.msra.mxu0 0.0
        %697 = vmatprep.subr.mxu0 0.0
        %698 = vmatpush1.msra.mxu0 0.0
        %699 = vmatprep.subr.mxu0 0.0
        %700 = vmatpush1.msra.mxu0 0.0
        %701 = vmatprep.subr.mxu0 0.0
        %702 = vmatpush1.msra.mxu0 0.0
        %703 = vmatprep.subr.mxu0 0.0
        %704 = vmatpush1.msra.mxu0 0.0
        %705 = vmatprep.subr.mxu0 0.0
        %706 = vmatpush1.msra.mxu0 0.0
        %707 = vmatprep.subr.mxu0 0.0
        %708 = vmatpush1.msra.mxu0 0.0
        %709 = vmatprep.subr.mxu0 0.0
        %710 = vmatpush1.msra.mxu0 0.0
        %711 = vmatprep.subr.mxu0 0.0
        %712 = vmatpush1.msra.mxu0 0.0
        %713 = vmatprep.subr.mxu0 0.0
        %714 = vmatpush1.msra.mxu0 0.0
        %715 = vmatprep.subr.mxu0 0.0
        %716 = vmatpush1.msra.mxu0 0.0
        %717 = vmatprep.mubr.f32.mxu0 0.0
        %718 = vmatmul.mubr.f32.gmra.mrb[0].mxu0 %v636
        %v719 = vpop.f32.mrb[0].mxu0
        %v720 = vadd.f32 0.0, %v719
        %v721 = vpop.f32.mrb[0].mxu0
        %v722 = vadd.f32 0.0, %v721
        %723 = vmatprep.mubr.f32.mxu0 0.0
        %724 = vmatmul.mubr.f32.gmra.mrb[0].mxu0 %v639
        %v725 = vpop.f32.mrb[0].mxu0
        %v726 = vadd.f32 0.0, %v725
        %v727 = vpop.f32.mrb[0].mxu0
        %v728 = vadd.f32 0.0, %v727
        %729 = vmatprep.mubr.f32.mxu0 0.0
        %730 = vmatmul.mubr.f32.gmra.mrb[0].mxu0 %v642
        %v731 = vpop.f32.mrb[0].mxu0
        %v732 = vadd.f32 0.0, %v731
        %v733 = vpop.f32.mrb[0].mxu0
        %v734 = vadd.f32 0.0, %v733
        %735 = vmatprep.mubr.f32.mxu0 0.0
        %736 = vmatmul.mubr.f32.gmra.mrb[0].mxu0 %v645
        %v737 = vpop.f32.mrb[0].mxu0
        %v738 = vadd.f32 0.0, %v737
        %v739 = vpop.f32.mrb[0].mxu0
        %v740 = vadd.f32 0.0, %v739
        %741 = vmatprep.mubr.f32.mxu0 0.0
        %742 = vmatmul.mubr.f32.gmra.mrb[0].mxu0 %v648
        %v743 = vpop.f32.mrb[0].mxu0
        %v744 = vadd.f32 0.0, %v743
        %v745 = vpop.f32.mrb[0].mxu0
        %v746 = vadd.f32 0.0, %v745
        %747 = vmatprep.mubr.f32.mxu0 0.0
        %748 = vmatmul.mubr.f32.gmra.mrb[0].mxu0 %v651
        %v749 = vpop.f32.mrb[0].mxu0
        %v750 = vadd.f32 0.0, %v749
        %v751 = vpop.f32.mrb[0].mxu0
        %v752 = vadd.f32 0.0, %v751
        %753 = vdwg.mxu0
        %v754 = vadd.f32 %v586, %v720
        %v755 = vadd.f32 %v588, %v722
        %v756 = vadd.f32 %v592, %v726
        %v757 = vadd.f32 %v594, %v728
        %v758 = vadd.f32 %v598, %v732
        %v759 = vadd.f32 %v600, %v734
        %v760 = vadd.f32 %v604, %v738
        %v761 = vadd.f32 %v606, %v740
        %v762 = vadd.f32 %v610, %v744
        %v763 = vadd.f32 %v612, %v746
        %v764 = vadd.f32 %v616, %v750
        %v765 = vadd.f32 %v618, %v752
        %v766 = vld [vmem:[%s349 + $0x3] sm:$0xff]
        %v767 = vld [vmem:[%s349 + $0xb] sm:$0xff]
        %v768 = vld [vmem:[%s349 + $0x13] sm:$0xff]
        %v769 = vld [vmem:[%s349 + $0x23] sm:$0xff]
        %v770 = vld [vmem:[%s349 + $0x2b] sm:$0xff]
        %v771 = vld [vmem:[%s349 + $0x33] sm:$0xff]
        %s772 = scalar_lea.vmem %s1, 192
        %v773 = vld [vmem:[%s772] sm:$0xff]
        %v774 = vld [vmem:[%s772 + $0x8] sm:$0xff]
        %v775 = vld [vmem:[%s772 + $0x10] sm:$0xff]
        %v776 = vld [vmem:[%s772 + $0x18] sm:$0xff]
        %v777 = vld [vmem:[%s772 + $0x20] sm:$0xff]
        %v778 = vld [vmem:[%s772 + $0x28] sm:$0xff]
        %v779 = vld [vmem:[%s772 + $0x30] sm:$0xff]
        %v780 = vld [vmem:[%s772 + $0x38] sm:$0xff]
        %v782 = vsel %vm381, %v766, 0
        %v785 = vsel %vm381, %v767, 0
        %v788 = vsel %vm381, %v768, 0
        %v791 = vsel %vm381, %v769, 0
        %v794 = vsel %vm381, %v770, 0
        %v797 = vsel %vm381, %v771, 0
        %799 = vmatprep.subr.mxu0 %v774
        %800 = vmatpush1.msra.mxu0 %v773
        %801 = vmatprep.subr.mxu0 %v776
        %802 = vmatpush1.msra.mxu0 %v775
        %803 = vmatprep.subr.mxu0 %v778
        %804 = vmatpush1.msra.mxu0 %v777
        %805 = vmatprep.subr.mxu0 %v780
        %806 = vmatpush1.msra.mxu0 %v779
        %807 = vmatprep.subr.mxu0 0.0
        %808 = vmatpush1.msra.mxu0 0.0
        %809 = vmatprep.subr.mxu0 0.0
        %810 = vmatpush1.msra.mxu0 0.0
        %811 = vmatprep.subr.mxu0 0.0
        %812 = vmatpush1.msra.mxu0 0.0
        %813 = vmatprep.subr.mxu0 0.0
        %814 = vmatpush1.msra.mxu0 0.0
        %815 = vmatprep.subr.mxu0 0.0
        %816 = vmatpush1.msra.mxu0 0.0
        %817 = vmatprep.subr.mxu0 0.0
        %818 = vmatpush1.msra.mxu0 0.0
        %819 = vmatprep.subr.mxu0 0.0
        %820 = vmatpush1.msra.mxu0 0.0
        %821 = vmatprep.subr.mxu0 0.0
        %822 = vmatpush1.msra.mxu0 0.0
        %823 = vmatprep.subr.mxu0 0.0
        %824 = vmatpush1.msra.mxu0 0.0
        %825 = vmatprep.subr.mxu0 0.0
        %826 = vmatpush1.msra.mxu0 0.0
        %827 = vmatprep.subr.mxu0 0.0
        %828 = vmatpush1.msra.mxu0 0.0
        %829 = vmatprep.subr.mxu0 0.0
        %830 = vmatpush1.msra.mxu0 0.0
        %831 = vmatprep.subr.mxu0 0.0
        %832 = vmatpush1.msra.mxu0 0.0
        %833 = vmatprep.subr.mxu0 0.0
        %834 = vmatpush1.msra.mxu0 0.0
        %835 = vmatprep.subr.mxu0 0.0
        %836 = vmatpush1.msra.mxu0 0.0
        %837 = vmatprep.subr.mxu0 0.0
        %838 = vmatpush1.msra.mxu0 0.0
        %839 = vmatprep.subr.mxu0 0.0
        %840 = vmatpush1.msra.mxu0 0.0
        %841 = vmatprep.subr.mxu0 0.0
        %842 = vmatpush1.msra.mxu0 0.0
        %843 = vmatprep.subr.mxu0 0.0
        %844 = vmatpush1.msra.mxu0 0.0
        %845 = vmatprep.subr.mxu0 0.0
        %846 = vmatpush1.msra.mxu0 0.0
        %847 = vmatprep.subr.mxu0 0.0
        %848 = vmatpush1.msra.mxu0 0.0
        %849 = vmatprep.subr.mxu0 0.0
        %850 = vmatpush1.msra.mxu0 0.0
        %851 = vmatprep.subr.mxu0 0.0
        %852 = vmatpush1.msra.mxu0 0.0
        %853 = vmatprep.subr.mxu0 0.0
        %854 = vmatpush1.msra.mxu0 0.0
        %855 = vmatprep.subr.mxu0 0.0
        %856 = vmatpush1.msra.mxu0 0.0
        %857 = vmatprep.subr.mxu0 0.0
        %858 = vmatpush1.msra.mxu0 0.0
        %859 = vmatprep.subr.mxu0 0.0
        %860 = vmatpush1.msra.mxu0 0.0
        %861 = vmatprep.subr.mxu0 0.0
        %862 = vmatpush1.msra.mxu0 0.0
        %863 = vmatprep.mubr.f32.mxu0 0.0
        %864 = vmatmul.mubr.f32.gmra.mrb[0].mxu0 %v782
        %v865 = vpop.f32.mrb[0].mxu0
        %v866 = vadd.f32 0.0, %v865
        %v867 = vpop.f32.mrb[0].mxu0
        %v868 = vadd.f32 0.0, %v867
        %869 = vmatprep.mubr.f32.mxu0 0.0
        %870 = vmatmul.mubr.f32.gmra.mrb[0].mxu0 %v785
        %v871 = vpop.f32.mrb[0].mxu0
        %v872 = vadd.f32 0.0, %v871
        %v873 = vpop.f32.mrb[0].mxu0
        %v874 = vadd.f32 0.0, %v873
        %875 = vmatprep.mubr.f32.mxu0 0.0
        %876 = vmatmul.mubr.f32.gmra.mrb[0].mxu0 %v788
        %v877 = vpop.f32.mrb[0].mxu0
        %v878 = vadd.f32 0.0, %v877
        %v879 = vpop.f32.mrb[0].mxu0
        %v880 = vadd.f32 0.0, %v879
        %881 = vmatprep.mubr.f32.mxu0 0.0
        %882 = vmatmul.mubr.f32.gmra.mrb[0].mxu0 %v791
        %v883 = vpop.f32.mrb[0].mxu0
        %v884 = vadd.f32 0.0, %v883
        %v885 = vpop.f32.mrb[0].mxu0
        %v886 = vadd.f32 0.0, %v885
        %887 = vmatprep.mubr.f32.mxu0 0.0
        %888 = vmatmul.mubr.f32.gmra.mrb[0].mxu0 %v794
        %v889 = vpop.f32.mrb[0].mxu0
        %v890 = vadd.f32 0.0, %v889
        %v891 = vpop.f32.mrb[0].mxu0
        %v892 = vadd.f32 0.0, %v891
        %893 = vmatprep.mubr.f32.mxu0 0.0
        %894 = vmatmul.mubr.f32.gmra.mrb[0].mxu0 %v797
        %v895 = vpop.f32.mrb[0].mxu0
        %v896 = vadd.f32 0.0, %v895
        %v897 = vpop.f32.mrb[0].mxu0
        %v898 = vadd.f32 0.0, %v897
        %899 = vdwg.mxu0
        %v900 = vadd.f32 %v754, %v866
        %v901 = vadd.f32 %v755, %v868
        %v902 = vadd.f32 %v756, %v872
        %v903 = vadd.f32 %v757, %v874
        %v904 = vadd.f32 %v758, %v878
        %v905 = vadd.f32 %v759, %v880
        %v906 = vadd.f32 %v760, %v884
        %v907 = vadd.f32 %v761, %v886
        %v908 = vadd.f32 %v762, %v890
        %v909 = vadd.f32 %v763, %v892
        %v910 = vadd.f32 %v764, %v896
        %v911 = vadd.f32 %v765, %v898
        %v912 = vld [vmem:[%s349 + $0x4] sm:$0xff]
        %v913 = vld [vmem:[%s349 + $0xc] sm:$0xff]
        %v914 = vld [vmem:[%s349 + $0x14] sm:$0xff]
        %v915 = vld [vmem:[%s349 + $0x24] sm:$0xff]
        %v916 = vld [vmem:[%s349 + $0x2c] sm:$0xff]
        %v917 = vld [vmem:[%s349 + $0x34] sm:$0xff]
        %s918 = scalar_lea.vmem %s1, 256
        %v919 = vld [vmem:[%s918] sm:$0xff]
        %v920 = vld [vmem:[%s918 + $0x8] sm:$0xff]
        %v921 = vld [vmem:[%s918 + $0x10] sm:$0xff]
        %v922 = vld [vmem:[%s918 + $0x18] sm:$0xff]
        %v923 = vld [vmem:[%s918 + $0x20] sm:$0xff]
        %v924 = vld [vmem:[%s918 + $0x28] sm:$0xff]
        %v925 = vld [vmem:[%s918 + $0x30] sm:$0xff]
        %v926 = vld [vmem:[%s918 + $0x38] sm:$0xff]
        %v928 = vsel %vm381, %v912, 0
        %v931 = vsel %vm381, %v913, 0
        %v934 = vsel %vm381, %v914, 0
        %v937 = vsel %vm381, %v915, 0
        %v940 = vsel %vm381, %v916, 0
        %v943 = vsel %vm381, %v917, 0
        %945 = vmatprep.subr.mxu0 %v920
        %946 = vmatpush1.msra.mxu0 %v919
        %947 = vmatprep.subr.mxu0 %v922
        %948 = vmatpush1.msra.mxu0 %v921
        %949 = vmatprep.subr.mxu0 %v924
        %950 = vmatpush1.msra.mxu0 %v923
        %951 = vmatprep.subr.mxu0 %v926
        %952 = vmatpush1.msra.mxu0 %v925
        %953 = vmatprep.subr.mxu0 0.0
        %954 = vmatpush1.msra.mxu0 0.0
        %955 = vmatprep.subr.mxu0 0.0
        %956 = vmatpush1.msra.mxu0 0.0
        %957 = vmatprep.subr.mxu0 0.0
        %958 = vmatpush1.msra.mxu0 0.0
        %959 = vmatprep.subr.mxu0 0.0
        %960 = vmatpush1.msra.mxu0 0.0
        %961 = vmatprep.subr.mxu0 0.0
        %962 = vmatpush1.msra.mxu0 0.0
        %963 = vmatprep.subr.mxu0 0.0
        %964 = vmatpush1.msra.mxu0 0.0
        %965 = vmatprep.subr.mxu0 0.0
        %966 = vmatpush1.msra.mxu0 0.0
        %967 = vmatprep.subr.mxu0 0.0
        %968 = vmatpush1.msra.mxu0 0.0
        %969 = vmatprep.subr.mxu0 0.0
        %970 = vmatpush1.msra.mxu0 0.0
        %971 = vmatprep.subr.mxu0 0.0
        %972 = vmatpush1.msra.mxu0 0.0
        %973 = vmatprep.subr.mxu0 0.0
        %974 = vmatpush1.msra.mxu0 0.0
        %975 = vmatprep.subr.mxu0 0.0
        %976 = vmatpush1.msra.mxu0 0.0
        %977 = vmatprep.subr.mxu0 0.0
        %978 = vmatpush1.msra.mxu0 0.0
        %979 = vmatprep.subr.mxu0 0.0
        %980 = vmatpush1.msra.mxu0 0.0
        %981 = vmatprep.subr.mxu0 0.0
        %982 = vmatpush1.msra.mxu0 0.0
        %983 = vmatprep.subr.mxu0 0.0
        %984 = vmatpush1.msra.mxu0 0.0
        %985 = vmatprep.subr.mxu0 0.0
        %986 = vmatpush1.msra.mxu0 0.0
        %987 = vmatprep.subr.mxu0 0.0
        %988 = vmatpush1.msra.mxu0 0.0
        %989 = vmatprep.subr.mxu0 0.0
        %990 = vmatpush1.msra.mxu0 0.0
        %991 = vmatprep.subr.mxu0 0.0
        %992 = vmatpush1.msra.mxu0 0.0
        %993 = vmatprep.subr.mxu0 0.0
        %994 = vmatpush1.msra.mxu0 0.0
        %995 = vmatprep.subr.mxu0 0.0
        %996 = vmatpush1.msra.mxu0 0.0
        %997 = vmatprep.subr.mxu0 0.0
        %998 = vmatpush1.msra.mxu0 0.0
        %999 = vmatprep.subr.mxu0 0.0
        %1000 = vmatpush1.msra.mxu0 0.0
        %1001 = vmatprep.subr.mxu0 0.0
        %1002 = vmatpush1.msra.mxu0 0.0
        %1003 = vmatprep.subr.mxu0 0.0
        %1004 = vmatpush1.msra.mxu0 0.0
        %1005 = vmatprep.subr.mxu0 0.0
        %1006 = vmatpush1.msra.mxu0 0.0
        %1007 = vmatprep.subr.mxu0 0.0
        %1008 = vmatpush1.msra.mxu0 0.0
        %1009 = vmatprep.mubr.f32.mxu0 0.0
        %1010 = vmatmul.mubr.f32.gmra.mrb[0].mxu0 %v928
        %v1011 = vpop.f32.mrb[0].mxu0
        %v1012 = vadd.f32 0.0, %v1011
        %v1013 = vpop.f32.mrb[0].mxu0
        %v1014 = vadd.f32 0.0, %v1013
        %1015 = vmatprep.mubr.f32.mxu0 0.0
        %1016 = vmatmul.mubr.f32.gmra.mrb[0].mxu0 %v931
        %v1017 = vpop.f32.mrb[0].mxu0
        %v1018 = vadd.f32 0.0, %v1017
        %v1019 = vpop.f32.mrb[0].mxu0
        %v1020 = vadd.f32 0.0, %v1019
        %1021 = vmatprep.mubr.f32.mxu0 0.0
        %1022 = vmatmul.mubr.f32.gmra.mrb[0].mxu0 %v934
        %v1023 = vpop.f32.mrb[0].mxu0
        %v1024 = vadd.f32 0.0, %v1023
        %v1025 = vpop.f32.mrb[0].mxu0
        %v1026 = vadd.f32 0.0, %v1025
        %1027 = vmatprep.mubr.f32.mxu0 0.0
        %1028 = vmatmul.mubr.f32.gmra.mrb[0].mxu0 %v937
        %v1029 = vpop.f32.mrb[0].mxu0
        %v1030 = vadd.f32 0.0, %v1029
        %v1031 = vpop.f32.mrb[0].mxu0
        %v1032 = vadd.f32 0.0, %v1031
        %1033 = vmatprep.mubr.f32.mxu0 0.0
        %1034 = vmatmul.mubr.f32.gmra.mrb[0].mxu0 %v940
        %v1035 = vpop.f32.mrb[0].mxu0
        %v1036 = vadd.f32 0.0, %v1035
        %v1037 = vpop.f32.mrb[0].mxu0
        %v1038 = vadd.f32 0.0, %v1037
        %1039 = vmatprep.mubr.f32.mxu0 0.0
        %1040 = vmatmul.mubr.f32.gmra.mrb[0].mxu0 %v943
        %v1041 = vpop.f32.mrb[0].mxu0
        %v1042 = vadd.f32 0.0, %v1041
        %v1043 = vpop.f32.mrb[0].mxu0
        %v1044 = vadd.f32 0.0, %v1043
        %1045 = vdwg.mxu0
        %v1046 = vadd.f32 %v900, %v1012
        %v1047 = vadd.f32 %v901, %v1014
        %v1048 = vadd.f32 %v902, %v1018
        %v1049 = vadd.f32 %v903, %v1020
        %v1050 = vadd.f32 %v904, %v1024
        %v1051 = vadd.f32 %v905, %v1026
        %v1052 = vadd.f32 %v906, %v1030
        %v1053 = vadd.f32 %v907, %v1032
        %v1054 = vadd.f32 %v908, %v1036
        %v1055 = vadd.f32 %v909, %v1038
        %v1056 = vadd.f32 %v910, %v1042
        %v1057 = vadd.f32 %v911, %v1044
        %v1058 = vmax.f32 %v1046, %v1047
        %v1059 = vmax.f32 %v1048, %v1049
        %v1060 = vmax.f32 %v1050, %v1051
        %v1061 = vmax.f32 %v1052, %v1053
        %v1062 = vmax.f32 %v1054, %v1055
        %v1063 = vmax.f32 %v1056, %v1057
        %v1070 = vcombine.high %v1058, %v1058
        %v1072 = vunpack.c.l.s4 1983009808
        %v1073 = vunpack.c.0.s8 %v1072
        %v1074 = vlaneseq
        %v1075 = vshrl.u32 %v1074, 7
        %v1076 = vsub.s32 %v1073, %v1075
        %v1077 = vrot.slane %v1058, %v1076
        %v1079 = vunpack.c.l.s4 1983009808
        %v1080 = vunpack.c.0.s8 %v1079
        %v1081 = vlaneseq
        %v1082 = vshrl.u32 %v1081, 7
        %v1083 = vsub.s32 %v1080, %v1082
        %v1084 = vrot.slane %v1070, %v1083
        %v1085 = vcombine.high %v1077, %v1077
        %v1086 = vcombine.high %v1084, %v1084
        %v1087 = vcombine.high %v1059, %v1059
        %v1089 = vunpack.c.l.s4 1983009808
        %v1090 = vunpack.c.0.s8 %v1089
        %v1091 = vlaneseq
        %v1092 = vshrl.u32 %v1091, 7
        %v1093 = vsub.s32 %v1090, %v1092
        %v1094 = vrot.slane %v1059, %v1093
        %v1096 = vunpack.c.l.s4 1983009808
        %v1097 = vunpack.c.0.s8 %v1096
        %v1098 = vlaneseq
        %v1099 = vshrl.u32 %v1098, 7
        %v1100 = vsub.s32 %v1097, %v1099
        %v1101 = vrot.slane %v1087, %v1100
        %v1102 = vcombine.high %v1094, %v1094
        %v1103 = vcombine.high %v1101, %v1101
        %v1104 = vcombine.high %v1060, %v1060
        %v1106 = vunpack.c.l.s4 1983009808
        %v1107 = vunpack.c.0.s8 %v1106
        %v1108 = vlaneseq
        %v1109 = vshrl.u32 %v1108, 7
        %v1110 = vsub.s32 %v1107, %v1109
        %v1111 = vrot.slane %v1060, %v1110
        %v1113 = vunpack.c.l.s4 1983009808
        %v1114 = vunpack.c.0.s8 %v1113
        %v1115 = vlaneseq
        %v1116 = vshrl.u32 %v1115, 7
        %v1117 = vsub.s32 %v1114, %v1116
        %v1118 = vrot.slane %v1104, %v1117
        %v1119 = vcombine.high %v1111, %v1111
        %v1120 = vcombine.high %v1118, %v1118
        %v1121 = vcombine.high %v1061, %v1061
        %v1123 = vunpack.c.l.s4 1983009808
        %v1124 = vunpack.c.0.s8 %v1123
        %v1125 = vlaneseq
        %v1126 = vshrl.u32 %v1125, 7
        %v1127 = vsub.s32 %v1124, %v1126
        %v1128 = vrot.slane %v1061, %v1127
        %v1130 = vunpack.c.l.s4 1983009808
        %v1131 = vunpack.c.0.s8 %v1130
        %v1132 = vlaneseq
        %v1133 = vshrl.u32 %v1132, 7
        %v1134 = vsub.s32 %v1131, %v1133
        %v1135 = vrot.slane %v1121, %v1134
        %v1136 = vcombine.high %v1128, %v1128
        %v1137 = vcombine.high %v1135, %v1135
        %v1138 = vcombine.high %v1062, %v1062
        %v1140 = vunpack.c.l.s4 1983009808
        %v1141 = vunpack.c.0.s8 %v1140
        %v1142 = vlaneseq
        %v1143 = vshrl.u32 %v1142, 7
        %v1144 = vsub.s32 %v1141, %v1143
        %v1145 = vrot.slane %v1062, %v1144
        %v1147 = vunpack.c.l.s4 1983009808
        %v1148 = vunpack.c.0.s8 %v1147
        %v1149 = vlaneseq
        %v1150 = vshrl.u32 %v1149, 7
        %v1151 = vsub.s32 %v1148, %v1150
        %v1152 = vrot.slane %v1138, %v1151
        %v1153 = vcombine.high %v1145, %v1145
        %v1154 = vcombine.high %v1152, %v1152
        %v1155 = vcombine.high %v1063, %v1063
        %v1157 = vunpack.c.l.s4 1983009808
        %v1158 = vunpack.c.0.s8 %v1157
        %v1159 = vlaneseq
        %v1160 = vshrl.u32 %v1159, 7
        %v1161 = vsub.s32 %v1158, %v1160
        %v1162 = vrot.slane %v1063, %v1161
        %v1164 = vunpack.c.l.s4 1983009808
        %v1165 = vunpack.c.0.s8 %v1164
        %v1166 = vlaneseq
        %v1167 = vshrl.u32 %v1166, 7
        %v1168 = vsub.s32 %v1165, %v1167
        %v1169 = vrot.slane %v1155, %v1168
        %v1170 = vcombine.high %v1162, %v1162
        %v1171 = vcombine.high %v1169, %v1169
        %v1196 = vrot.slane %v1077, 7
        %v1197 = vrot.slane %v1196, 2
        %v1198 = vrot.slane %v1085, 7
        %v1199 = vrot.slane %v1198, 2
        %v1200 = vrot.slane %v1084, 7
        %v1201 = vrot.slane %v1200, 2
        %v1202 = vrot.slane %v1086, 7
        %v1203 = vrot.slane %v1202, 2
        %v1204 = vrot.slane %v1094, 7
        %v1205 = vrot.slane %v1204, 2
        %v1206 = vrot.slane %v1102, 7
        %v1207 = vrot.slane %v1206, 2
        %v1208 = vrot.slane %v1101, 7
        %v1209 = vrot.slane %v1208, 2
        %v1210 = vrot.slane %v1103, 7
        %v1211 = vrot.slane %v1210, 2
        %v1212 = vrot.slane %v1111, 7
        %v1213 = vrot.slane %v1212, 2
        %v1214 = vrot.slane %v1119, 7
        %v1215 = vrot.slane %v1214, 2
        %v1216 = vrot.slane %v1118, 7
        %v1217 = vrot.slane %v1216, 2
        %v1218 = vrot.slane %v1120, 7
        %v1219 = vrot.slane %v1218, 2
        %v1220 = vrot.slane %v1128, 7
        %v1221 = vrot.slane %v1220, 2
        %v1222 = vrot.slane %v1136, 7
        %v1223 = vrot.slane %v1222, 2
        %v1224 = vrot.slane %v1135, 7
        %v1225 = vrot.slane %v1224, 2
        %v1226 = vrot.slane %v1137, 7
        %v1227 = vrot.slane %v1226, 2
        %v1228 = vrot.slane %v1145, 7
        %v1229 = vrot.slane %v1228, 2
        %v1230 = vrot.slane %v1153, 7
        %v1231 = vrot.slane %v1230, 2
        %v1232 = vrot.slane %v1152, 7
        %v1233 = vrot.slane %v1232, 2
        %v1234 = vrot.slane %v1154, 7
        %v1235 = vrot.slane %v1234, 2
        %v1236 = vrot.slane %v1162, 7
        %v1237 = vrot.slane %v1236, 2
        %v1238 = vrot.slane %v1170, 7
        %v1239 = vrot.slane %v1238, 2
        %v1240 = vrot.slane %v1169, 7
        %v1241 = vrot.slane %v1240, 2
        %v1242 = vrot.slane %v1171, 7
        %v1243 = vrot.slane %v1242, 2
        %v1268 = vmax.f32 %v1077, %v1197
        %v1269 = vmax.f32 %v1085, %v1199
        %v1270 = vmax.f32 %v1084, %v1201
        %v1271 = vmax.f32 %v1086, %v1203
        %v1272 = vmax.f32 %v1094, %v1205
        %v1273 = vmax.f32 %v1102, %v1207
        %v1274 = vmax.f32 %v1101, %v1209
        %v1275 = vmax.f32 %v1103, %v1211
        %v1276 = vmax.f32 %v1111, %v1213
        %v1277 = vmax.f32 %v1119, %v1215
        %v1278 = vmax.f32 %v1118, %v1217
        %v1279 = vmax.f32 %v1120, %v1219
        %v1280 = vmax.f32 %v1128, %v1221
        %v1281 = vmax.f32 %v1136, %v1223
        %v1282 = vmax.f32 %v1135, %v1225
        %v1283 = vmax.f32 %v1137, %v1227
        %v1284 = vmax.f32 %v1145, %v1229
        %v1285 = vmax.f32 %v1153, %v1231
        %v1286 = vmax.f32 %v1152, %v1233
        %v1287 = vmax.f32 %v1154, %v1235
        %v1288 = vmax.f32 %v1162, %v1237
        %v1289 = vmax.f32 %v1170, %v1239
        %v1290 = vmax.f32 %v1169, %v1241
        %v1291 = vmax.f32 %v1171, %v1243
        %v1292 = vld [vmem:[%s2] sm:$0x1]
        %v1294 = vlaneseq
        %v1295 = vshrl.u32 %v1294, 7
        %v1296 = vsub.s32 0, %v1295
        %v1297 = vrot.slane %v1292, %v1296
        %v1298 = vcombine.high %v1297, %v1297
        %v1300 = vunpack.c.l.s4 1983009808
        %v1301 = vunpack.c.0.s8 %v1300
        %v1302 = vlaneseq
        %v1303 = vshrl.u32 %v1302, 7
        %v1304 = vsub.s32 %v1301, %v1303
        %v1305 = vrot.slane %v1297, %v1304
        %v1307 = vunpack.c.l.s4 1983009808
        %v1308 = vunpack.c.0.s8 %v1307
        %v1309 = vlaneseq
        %v1310 = vshrl.u32 %v1309, 7
        %v1311 = vsub.s32 %v1308, %v1310
        %v1312 = vrot.slane %v1298, %v1311
        %v1313 = vcombine.high %v1305, %v1305
        %v1314 = vcombine.high %v1312, %v1312
        %v1315 = vrot.slane %v1305, 1
        %v1316 = vrot.slane %v1313, 1
        %v1317 = vrot.slane %v1312, 1
        %v1318 = vrot.slane %v1314, 1
        %v1327 = vadd.f32 %v1268, %v1305
        %v1328 = vadd.f32 %v1269, %v1315
        %v1329 = vadd.f32 %v1270, %v1313
        %v1330 = vadd.f32 %v1271, %v1316
        %v1331 = vadd.f32 %v1272, %v1312
        %v1332 = vadd.f32 %v1273, %v1317
        %v1333 = vadd.f32 %v1274, %v1314
        %v1334 = vadd.f32 %v1275, %v1318
        %v1335 = vadd.f32 %v1276, %v1305
        %v1336 = vadd.f32 %v1277, %v1315
        %v1337 = vadd.f32 %v1278, %v1313
        %v1338 = vadd.f32 %v1279, %v1316
        %v1339 = vadd.f32 %v1280, %v1305
        %v1340 = vadd.f32 %v1281, %v1315
        %v1341 = vadd.f32 %v1282, %v1313
        %v1342 = vadd.f32 %v1283, %v1316
        %v1343 = vadd.f32 %v1284, %v1312
        %v1344 = vadd.f32 %v1285, %v1317
        %v1345 = vadd.f32 %v1286, %v1314
        %v1346 = vadd.f32 %v1287, %v1318
        %v1347 = vadd.f32 %v1288, %v1305
        %v1348 = vadd.f32 %v1289, %v1315
        %v1349 = vadd.f32 %v1290, %v1313
        %v1350 = vadd.f32 %v1291, %v1316
        %v1351 = vmax.f32 %v1327, 0.0
        %v1352 = vmax.f32 %v1328, 0.0
        %v1353 = vmax.f32 %v1329, 0.0
        %v1354 = vmax.f32 %v1330, 0.0
        %v1355 = vmax.f32 %v1331, 0.0
        %v1356 = vmax.f32 %v1332, 0.0
        %v1357 = vmax.f32 %v1333, 0.0
        %v1358 = vmax.f32 %v1334, 0.0
        %v1359 = vmax.f32 %v1335, 0.0
        %v1360 = vmax.f32 %v1336, 0.0
        %v1361 = vmax.f32 %v1337, 0.0
        %v1362 = vmax.f32 %v1338, 0.0
        %v1363 = vmax.f32 %v1339, 0.0
        %v1364 = vmax.f32 %v1340, 0.0
        %v1365 = vmax.f32 %v1341, 0.0
        %v1366 = vmax.f32 %v1342, 0.0
        %v1367 = vmax.f32 %v1343, 0.0
        %v1368 = vmax.f32 %v1344, 0.0
        %v1369 = vmax.f32 %v1345, 0.0
        %v1370 = vmax.f32 %v1346, 0.0
        %v1371 = vmax.f32 %v1347, 0.0
        %v1372 = vmax.f32 %v1348, 0.0
        %v1373 = vmax.f32 %v1349, 0.0
        %v1374 = vmax.f32 %v1350, 0.0
        %v1375 = vld [vmem:[#allocation2] sm:$0xff]
        %v1376 = vld [vmem:[#allocation2 + $0x8] sm:$0xff]
        %v1377 = vld [vmem:[#allocation2 + $0x10] sm:$0xff]
        %v1378 = vld [vmem:[#allocation2 + $0x18] sm:$0xff]
        %v1379 = vld [vmem:[#allocation2 + $0x20] sm:$0xff]
        %v1380 = vld [vmem:[#allocation2 + $0x28] sm:$0xff]
        %v1381 = vld [vmem:[#allocation2 + $0x30] sm:$0xff]
        %v1382 = vld [vmem:[#allocation2 + $0x38] sm:$0xff]
        %v1383 = vld [vmem:[#allocation2 + $0x40] sm:$0xff]
        %v1384 = vld [vmem:[#allocation2 + $0x48] sm:$0xff]
        %v1385 = vld [vmem:[#allocation2 + $0x50] sm:$0xff]
        %v1386 = vld [vmem:[#allocation2 + $0x58] sm:$0xff]
        %v1387 = vld [vmem:[#allocation2 + $0x60] sm:$0xff]
        %v1388 = vld [vmem:[#allocation2 + $0x68] sm:$0xff]
        %v1389 = vld [vmem:[#allocation2 + $0x70] sm:$0xff]
        %v1390 = vld [vmem:[#allocation2 + $0x78] sm:$0xff]
        %v1391 = vld [vmem:[#allocation2 + $0x80] sm:$0xff]
        %v1392 = vld [vmem:[#allocation2 + $0x88] sm:$0xff]
        %v1393 = vld [vmem:[#allocation2 + $0x90] sm:$0xff]
        %v1394 = vld [vmem:[#allocation2 + $0x98] sm:$0xff]
        %v1395 = vld [vmem:[#allocation2 + $0xa0] sm:$0xff]
        %v1396 = vld [vmem:[#allocation2 + $0xa8] sm:$0xff]
        %v1397 = vld [vmem:[#allocation2 + $0xb0] sm:$0xff]
        %v1398 = vld [vmem:[#allocation2 + $0xb8] sm:$0xff]
        %v1399 = vld [vmem:[#allocation2 + $0xc0] sm:$0xff]
        %v1400 = vld [vmem:[#allocation2 + $0xc8] sm:$0xff]
        %v1401 = vld [vmem:[#allocation2 + $0xd0] sm:$0xff]
        %v1402 = vld [vmem:[#allocation2 + $0xd8] sm:$0xff]
        %v1403 = vld [vmem:[#allocation2 + $0xe0] sm:$0xff]
        %v1404 = vld [vmem:[#allocation2 + $0xe8] sm:$0xff]
        %v1405 = vld [vmem:[#allocation2 + $0xf0] sm:$0xff]
        %v1406 = vld [vmem:[#allocation2 + $0xf8] sm:$0xff]
        %s1407 = scalar_lea.vmem [#allocation2], 256
        %v1408 = vld [vmem:[%s1407] sm:$0xff]
        %v1409 = vld [vmem:[%s1407 + $0x8] sm:$0xff]
        %v1410 = vld [vmem:[%s1407 + $0x10] sm:$0xff]
        %v1411 = vld [vmem:[%s1407 + $0x18] sm:$0xff]
        %v1412 = vld [vmem:[%s1407 + $0x20] sm:$0xff]
        %v1413 = vld [vmem:[%s1407 + $0x28] sm:$0xff]
        %v1414 = vld [vmem:[%s1407 + $0x30] sm:$0xff]
        %v1415 = vld [vmem:[%s1407 + $0x38] sm:$0xff]
        %v1416 = vld [vmem:[%s1407 + $0x40] sm:$0xff]
        %v1417 = vld [vmem:[%s1407 + $0x48] sm:$0xff]
        %v1418 = vld [vmem:[%s1407 + $0x50] sm:$0xff]
        %v1419 = vld [vmem:[%s1407 + $0x58] sm:$0xff]
        %v1420 = vld [vmem:[%s1407 + $0x60] sm:$0xff]
        %v1421 = vld [vmem:[%s1407 + $0x68] sm:$0xff]
        %v1422 = vld [vmem:[%s1407 + $0x70] sm:$0xff]
        %v1423 = vld [vmem:[%s1407 + $0x78] sm:$0xff]
        %v1424 = vld [vmem:[%s1407 + $0x80] sm:$0xff]
        %v1425 = vld [vmem:[%s1407 + $0x88] sm:$0xff]
        %v1426 = vld [vmem:[%s1407 + $0x90] sm:$0xff]
        %v1427 = vld [vmem:[%s1407 + $0x98] sm:$0xff]
        %v1428 = vld [vmem:[%s1407 + $0xa0] sm:$0xff]
        %v1429 = vld [vmem:[%s1407 + $0xa8] sm:$0xff]
        %v1430 = vld [vmem:[%s1407 + $0xb0] sm:$0xff]
        %v1431 = vld [vmem:[%s1407 + $0xb8] sm:$0xff]
        %v1432 = vld [vmem:[%s1407 + $0xc0] sm:$0xff]
        %v1433 = vld [vmem:[%s1407 + $0xc8] sm:$0xff]
        %v1434 = vld [vmem:[%s1407 + $0xd0] sm:$0xff]
        %v1435 = vld [vmem:[%s1407 + $0xd8] sm:$0xff]
        %v1436 = vld [vmem:[%s1407 + $0xe0] sm:$0xff]
        %v1437 = vld [vmem:[%s1407 + $0xe8] sm:$0xff]
        %v1438 = vld [vmem:[%s1407 + $0xf0] sm:$0xff]
        %v1439 = vld [vmem:[%s1407 + $0xf8] sm:$0xff]
        %v1456 = vlaneseq
        %v1457 = vshrl.u32 %v1456, 7
        %v1458 = vsub.s32 0, %v1457
        %v1459 = vrot.slane %v1352, %v1458
        %v1460 = vlaneseq
        %v1461 = vshrl.u32 %v1460, 7
        %v1462 = vsub.s32 0, %v1461
        %v1463 = vrot.slane %v1353, %v1462
        %v1464 = vlaneseq
        %v1465 = vshrl.u32 %v1464, 7
        %v1466 = vsub.s32 0, %v1465
        %v1467 = vrot.slane %v1354, %v1466
        %v1468 = vlaneseq
        %v1469 = vshrl.u32 %v1468, 7
        %v1470 = vsub.s32 0, %v1469
        %v1471 = vrot.slane %v1355, %v1470
        %v1472 = vlaneseq
        %v1473 = vshrl.u32 %v1472, 7
        %v1474 = vsub.s32 0, %v1473
        %v1475 = vrot.slane %v1356, %v1474
        %v1476 = vlaneseq
        %v1477 = vshrl.u32 %v1476, 7
        %v1478 = vsub.s32 0, %v1477
        %v1479 = vrot.slane %v1357, %v1478
        %v1480 = vlaneseq
        %v1481 = vshrl.u32 %v1480, 7
        %v1482 = vsub.s32 0, %v1481
        %v1483 = vrot.slane %v1358, %v1482
        %v1484 = vlaneseq
        %v1485 = vshrl.u32 %v1484, 7
        %v1486 = vsub.s32 0, %v1485
        %v1487 = vrot.slane %v1359, %v1486
        %v1488 = vlaneseq
        %v1489 = vshrl.u32 %v1488, 7
        %v1490 = vsub.s32 0, %v1489
        %v1491 = vrot.slane %v1364, %v1490
        %v1492 = vlaneseq
        %v1493 = vshrl.u32 %v1492, 7
        %v1494 = vsub.s32 0, %v1493
        %v1495 = vrot.slane %v1365, %v1494
        %v1496 = vlaneseq
        %v1497 = vshrl.u32 %v1496, 7
        %v1498 = vsub.s32 0, %v1497
        %v1499 = vrot.slane %v1366, %v1498
        %v1500 = vlaneseq
        %v1501 = vshrl.u32 %v1500, 7
        %v1502 = vsub.s32 0, %v1501
        %v1503 = vrot.slane %v1367, %v1502
        %v1504 = vlaneseq
        %v1505 = vshrl.u32 %v1504, 7
        %v1506 = vsub.s32 0, %v1505
        %v1507 = vrot.slane %v1368, %v1506
        %v1508 = vlaneseq
        %v1509 = vshrl.u32 %v1508, 7
        %v1510 = vsub.s32 0, %v1509
        %v1511 = vrot.slane %v1369, %v1510
        %v1512 = vlaneseq
        %v1513 = vshrl.u32 %v1512, 7
        %v1514 = vsub.s32 0, %v1513
        %v1515 = vrot.slane %v1370, %v1514
        %v1516 = vlaneseq
        %v1517 = vshrl.u32 %v1516, 7
        %v1518 = vsub.s32 0, %v1517
        %v1519 = vrot.slane %v1371, %v1518
        %vm1520 = vcmask 1041409
        %v1521 = vsel %vm1520, %v1463, %v1459
        %vm1522 = vcmask 1042434
        %v1523 = vsel %vm1522, %v1467, %v1521
        %vm1524 = vcmask 1043459
        %v1525 = vsel %vm1524, %v1471, %v1523
        %vm1526 = vcmask 1044484
        %v1527 = vsel %vm1526, %v1475, %v1525
        %vm1528 = vcmask 1045509
        %v1529 = vsel %vm1528, %v1479, %v1527
        %vm1530 = vcmask 1046534
        %v1531 = vsel %vm1530, %v1483, %v1529
        %vm1532 = vcmask 1047559
        %v1533 = vsel %vm1532, %v1487, %v1531
        %v1534 = vsel %vm1520, %v1495, %v1491
        %v1535 = vsel %vm1522, %v1499, %v1534
        %v1536 = vsel %vm1524, %v1503, %v1535
        %v1537 = vsel %vm1526, %v1507, %v1536
        %v1538 = vsel %vm1528, %v1511, %v1537
        %v1539 = vsel %vm1530, %v1515, %v1538
        %v1540 = vsel %vm1532, %v1519, %v1539
        %1543 = vmatprep.subr.mxu0 %v1409
        %1544 = vmatpush1.msra.mxu0 %v1408
        %1545 = vmatprep.subr.mxu0 %v1411
        %1546 = vmatpush1.msra.mxu0 %v1410
        %1547 = vmatprep.subr.mxu0 %v1413
        %1548 = vmatpush1.msra.mxu0 %v1412
        %1549 = vmatprep.subr.mxu0 %v1415
        %1550 = vmatpush1.msra.mxu0 %v1414
        %1551 = vmatprep.subr.mxu0 %v1417
        %1552 = vmatpush1.msra.mxu0 %v1416
        %1553 = vmatprep.subr.mxu0 %v1419
        %1554 = vmatpush1.msra.mxu0 %v1418
        %1555 = vmatprep.subr.mxu0 %v1421
        %1556 = vmatpush1.msra.mxu0 %v1420
        %1557 = vmatprep.subr.mxu0 %v1423
        %1558 = vmatpush1.msra.mxu0 %v1422
        %1559 = vmatprep.subr.mxu0 %v1425
        %1560 = vmatpush1.msra.mxu0 %v1424
        %1561 = vmatprep.subr.mxu0 %v1427
        %1562 = vmatpush1.msra.mxu0 %v1426
        %1563 = vmatprep.subr.mxu0 %v1429
        %1564 = vmatpush1.msra.mxu0 %v1428
        %1565 = vmatprep.subr.mxu0 %v1431
        %1566 = vmatpush1.msra.mxu0 %v1430
        %1567 = vmatprep.subr.mxu0 %v1433
        %1568 = vmatpush1.msra.mxu0 %v1432
        %1569 = vmatprep.subr.mxu0 %v1435
        %1570 = vmatpush1.msra.mxu0 %v1434
        %1571 = vmatprep.subr.mxu0 %v1437
        %1572 = vmatpush1.msra.mxu0 %v1436
        %1573 = vmatprep.subr.mxu0 %v1439
        %1574 = vmatpush1.msra.mxu0 %v1438
        %1575 = vmatprep.subr.mxu0 0.0
        %1576 = vmatpush1.msra.mxu0 0.0
        %1577 = vmatprep.subr.mxu0 0.0
        %1578 = vmatpush1.msra.mxu0 0.0
        %1579 = vmatprep.subr.mxu0 0.0
        %1580 = vmatpush1.msra.mxu0 0.0
        %1581 = vmatprep.subr.mxu0 0.0
        %1582 = vmatpush1.msra.mxu0 0.0
        %1583 = vmatprep.subr.mxu0 0.0
        %1584 = vmatpush1.msra.mxu0 0.0
        %1585 = vmatprep.subr.mxu0 0.0
        %1586 = vmatpush1.msra.mxu0 0.0
        %1587 = vmatprep.subr.mxu0 0.0
        %1588 = vmatpush1.msra.mxu0 0.0
        %1589 = vmatprep.subr.mxu0 0.0
        %1590 = vmatpush1.msra.mxu0 0.0
        %1591 = vmatprep.subr.mxu0 0.0
        %1592 = vmatpush1.msra.mxu0 0.0
        %1593 = vmatprep.subr.mxu0 0.0
        %1594 = vmatpush1.msra.mxu0 0.0
        %1595 = vmatprep.subr.mxu0 0.0
        %1596 = vmatpush1.msra.mxu0 0.0
        %1597 = vmatprep.subr.mxu0 0.0
        %1598 = vmatpush1.msra.mxu0 0.0
        %1599 = vmatprep.subr.mxu0 0.0
        %1600 = vmatpush1.msra.mxu0 0.0
        %1601 = vmatprep.subr.mxu0 0.0
        %1602 = vmatpush1.msra.mxu0 0.0
        %1603 = vmatprep.subr.mxu0 0.0
        %1604 = vmatpush1.msra.mxu0 0.0
        %1605 = vmatprep.subr.mxu0 0.0
        %1606 = vmatpush1.msra.mxu0 0.0
        %1607 = vmatprep.mubr.f32.mxu0 0.0
        %1608 = vmatmul.mubr.f32.gmra.mrb[0].mxu0 %v1533
        %v1609 = vpop.f32.mrb[0].mxu0
        %v1610 = vadd.f32 0.0, %v1609
        %v1611 = vpop.f32.mrb[0].mxu0
        %v1612 = vadd.f32 0.0, %v1611
        %1613 = vmatprep.mubr.f32.mxu0 0.0
        %1614 = vmatmul.mubr.f32.gmra.mrb[0].mxu0 %v1540
        %v1615 = vpop.f32.mrb[0].mxu0
        %v1616 = vadd.f32 0.0, %v1615
        %v1617 = vpop.f32.mrb[0].mxu0
        %v1618 = vadd.f32 0.0, %v1617
        %1619 = vdwg.mxu0
        %v1622 = vlaneseq
        %v1623 = vshrl.u32 %v1622, 7
        %v1624 = vsub.s32 0, %v1623
        %v1625 = vrot.slane %v1351, %v1624
        %v1626 = vlaneseq
        %v1627 = vshrl.u32 %v1626, 7
        %v1628 = vsub.s32 0, %v1627
        %v1629 = vrot.slane %v1363, %v1628
        %v1630 = vsel %vm1520, %v1459, %v1625
        %v1631 = vsel %vm1522, %v1463, %v1630
        %v1632 = vsel %vm1524, %v1467, %v1631
        %v1633 = vsel %vm1526, %v1471, %v1632
        %v1634 = vsel %vm1528, %v1475, %v1633
        %v1635 = vsel %vm1530, %v1479, %v1634
        %v1636 = vsel %vm1532, %v1483, %v1635
        %v1637 = vsel %vm1520, %v1491, %v1629
        %v1638 = vsel %vm1522, %v1495, %v1637
        %v1639 = vsel %vm1524, %v1499, %v1638
        %v1640 = vsel %vm1526, %v1503, %v1639
        %v1641 = vsel %vm1528, %v1507, %v1640
        %v1642 = vsel %vm1530, %v1511, %v1641
        %v1643 = vsel %vm1532, %v1515, %v1642
        %1646 = vmatprep.subr.mxu0 %v1376
        %1647 = vmatpush1.msra.mxu0 %v1375
        %1648 = vmatprep.subr.mxu0 %v1378
        %1649 = vmatpush1.msra.mxu0 %v1377
        %1650 = vmatprep.subr.mxu0 %v1380
        %1651 = vmatpush1.msra.mxu0 %v1379
        %1652 = vmatprep.subr.mxu0 %v1382
        %1653 = vmatpush1.msra.mxu0 %v1381
        %1654 = vmatprep.subr.mxu0 %v1384
        %1655 = vmatpush1.msra.mxu0 %v1383
        %1656 = vmatprep.subr.mxu0 %v1386
        %1657 = vmatpush1.msra.mxu0 %v1385
        %1658 = vmatprep.subr.mxu0 %v1388
        %1659 = vmatpush1.msra.mxu0 %v1387
        %1660 = vmatprep.subr.mxu0 %v1390
        %1661 = vmatpush1.msra.mxu0 %v1389
        %1662 = vmatprep.subr.mxu0 %v1392
        %1663 = vmatpush1.msra.mxu0 %v1391
        %1664 = vmatprep.subr.mxu0 %v1394
        %1665 = vmatpush1.msra.mxu0 %v1393
        %1666 = vmatprep.subr.mxu0 %v1396
        %1667 = vmatpush1.msra.mxu0 %v1395
        %1668 = vmatprep.subr.mxu0 %v1398
        %1669 = vmatpush1.msra.mxu0 %v1397
        %1670 = vmatprep.subr.mxu0 %v1400
        %1671 = vmatpush1.msra.mxu0 %v1399
        %1672 = vmatprep.subr.mxu0 %v1402
        %1673 = vmatpush1.msra.mxu0 %v1401
        %1674 = vmatprep.subr.mxu0 %v1404
        %1675 = vmatpush1.msra.mxu0 %v1403
        %1676 = vmatprep.subr.mxu0 %v1406
        %1677 = vmatpush1.msra.mxu0 %v1405
        %1678 = vmatprep.subr.mxu0 0.0
        %1679 = vmatpush1.msra.mxu0 0.0
        %1680 = vmatprep.subr.mxu0 0.0
        %1681 = vmatpush1.msra.mxu0 0.0
        %1682 = vmatprep.subr.mxu0 0.0
        %1683 = vmatpush1.msra.mxu0 0.0
        %1684 = vmatprep.subr.mxu0 0.0
        %1685 = vmatpush1.msra.mxu0 0.0
        %1686 = vmatprep.subr.mxu0 0.0
        %1687 = vmatpush1.msra.mxu0 0.0
        %1688 = vmatprep.subr.mxu0 0.0
        %1689 = vmatpush1.msra.mxu0 0.0
        %1690 = vmatprep.subr.mxu0 0.0
        %1691 = vmatpush1.msra.mxu0 0.0
        %1692 = vmatprep.subr.mxu0 0.0
        %1693 = vmatpush1.msra.mxu0 0.0
        %1694 = vmatprep.subr.mxu0 0.0
        %1695 = vmatpush1.msra.mxu0 0.0
        %1696 = vmatprep.subr.mxu0 0.0
        %1697 = vmatpush1.msra.mxu0 0.0
        %1698 = vmatprep.subr.mxu0 0.0
        %1699 = vmatpush1.msra.mxu0 0.0
        %1700 = vmatprep.subr.mxu0 0.0
        %1701 = vmatpush1.msra.mxu0 0.0
        %1702 = vmatprep.subr.mxu0 0.0
        %1703 = vmatpush1.msra.mxu0 0.0
        %1704 = vmatprep.subr.mxu0 0.0
        %1705 = vmatpush1.msra.mxu0 0.0
        %1706 = vmatprep.subr.mxu0 0.0
        %1707 = vmatpush1.msra.mxu0 0.0
        %1708 = vmatprep.subr.mxu0 0.0
        %1709 = vmatpush1.msra.mxu0 0.0
        %1710 = vmatprep.mubr.f32.mxu0 0.0
        %1711 = vmatmul.mubr.f32.gmra.mrb[0].mxu0 %v1636
        %v1712 = vpop.f32.mrb[0].mxu0
        %v1713 = vadd.f32 %v1610, %v1712
        %v1714 = vpop.f32.mrb[0].mxu0
        %v1715 = vadd.f32 %v1612, %v1714
        %1716 = vmatprep.mubr.f32.mxu0 0.0
        %1717 = vmatmul.mubr.f32.gmra.mrb[0].mxu0 %v1643
        %v1718 = vpop.f32.mrb[0].mxu0
        %v1719 = vadd.f32 %v1616, %v1718
        %v1720 = vpop.f32.mrb[0].mxu0
        %v1721 = vadd.f32 %v1618, %v1720
        %1722 = vdwg.mxu0
        %s1723 = scalar_lea.vmem [#allocation2], 512
        %v1724 = vld [vmem:[%s1723] sm:$0xff]
        %v1725 = vld [vmem:[%s1723 + $0x8] sm:$0xff]
        %v1726 = vld [vmem:[%s1723 + $0x10] sm:$0xff]
        %v1727 = vld [vmem:[%s1723 + $0x18] sm:$0xff]
        %v1728 = vld [vmem:[%s1723 + $0x20] sm:$0xff]
        %v1729 = vld [vmem:[%s1723 + $0x28] sm:$0xff]
        %v1730 = vld [vmem:[%s1723 + $0x30] sm:$0xff]
        %v1731 = vld [vmem:[%s1723 + $0x38] sm:$0xff]
        %v1732 = vld [vmem:[%s1723 + $0x40] sm:$0xff]
        %v1733 = vld [vmem:[%s1723 + $0x48] sm:$0xff]
        %v1734 = vld [vmem:[%s1723 + $0x50] sm:$0xff]
        %v1735 = vld [vmem:[%s1723 + $0x58] sm:$0xff]
        %v1736 = vld [vmem:[%s1723 + $0x60] sm:$0xff]
        %v1737 = vld [vmem:[%s1723 + $0x68] sm:$0xff]
        %v1738 = vld [vmem:[%s1723 + $0x70] sm:$0xff]
        %v1739 = vld [vmem:[%s1723 + $0x78] sm:$0xff]
        %v1740 = vld [vmem:[%s1723 + $0x80] sm:$0xff]
        %v1741 = vld [vmem:[%s1723 + $0x88] sm:$0xff]
        %v1742 = vld [vmem:[%s1723 + $0x90] sm:$0xff]
        %v1743 = vld [vmem:[%s1723 + $0x98] sm:$0xff]
        %v1744 = vld [vmem:[%s1723 + $0xa0] sm:$0xff]
        %v1745 = vld [vmem:[%s1723 + $0xa8] sm:$0xff]
        %v1746 = vld [vmem:[%s1723 + $0xb0] sm:$0xff]
        %v1747 = vld [vmem:[%s1723 + $0xb8] sm:$0xff]
        %v1748 = vld [vmem:[%s1723 + $0xc0] sm:$0xff]
        %v1749 = vld [vmem:[%s1723 + $0xc8] sm:$0xff]
        %v1750 = vld [vmem:[%s1723 + $0xd0] sm:$0xff]
        %v1751 = vld [vmem:[%s1723 + $0xd8] sm:$0xff]
        %v1752 = vld [vmem:[%s1723 + $0xe0] sm:$0xff]
        %v1753 = vld [vmem:[%s1723 + $0xe8] sm:$0xff]
        %v1754 = vld [vmem:[%s1723 + $0xf0] sm:$0xff]
        %v1755 = vld [vmem:[%s1723 + $0xf8] sm:$0xff]
        %v1758 = vlaneseq
        %v1759 = vshrl.u32 %v1758, 7
        %v1760 = vsub.s32 0, %v1759
        %v1761 = vrot.slane %v1360, %v1760
        %v1762 = vlaneseq
        %v1763 = vshrl.u32 %v1762, 7
        %v1764 = vsub.s32 0, %v1763
        %v1765 = vrot.slane %v1372, %v1764
        %v1766 = vsel %vm1520, %v1467, %v1463
        %v1767 = vsel %vm1522, %v1471, %v1766
        %v1768 = vsel %vm1524, %v1475, %v1767
        %v1769 = vsel %vm1526, %v1479, %v1768
        %v1770 = vsel %vm1528, %v1483, %v1769
        %v1771 = vsel %vm1530, %v1487, %v1770
        %v1772 = vsel %vm1532, %v1761, %v1771
        %v1773 = vsel %vm1520, %v1499, %v1495
        %v1774 = vsel %vm1522, %v1503, %v1773
        %v1775 = vsel %vm1524, %v1507, %v1774
        %v1776 = vsel %vm1526, %v1511, %v1775
        %v1777 = vsel %vm1528, %v1515, %v1776
        %v1778 = vsel %vm1530, %v1519, %v1777
        %v1779 = vsel %vm1532, %v1765, %v1778
        %1782 = vmatprep.subr.mxu0 %v1725
        %1783 = vmatpush1.msra.mxu0 %v1724
        %1784 = vmatprep.subr.mxu0 %v1727
        %1785 = vmatpush1.msra.mxu0 %v1726
        %1786 = vmatprep.subr.mxu0 %v1729
        %1787 = vmatpush1.msra.mxu0 %v1728
        %1788 = vmatprep.subr.mxu0 %v1731
        %1789 = vmatpush1.msra.mxu0 %v1730
        %1790 = vmatprep.subr.mxu0 %v1733
        %1791 = vmatpush1.msra.mxu0 %v1732
        %1792 = vmatprep.subr.mxu0 %v1735
        %1793 = vmatpush1.msra.mxu0 %v1734
        %1794 = vmatprep.subr.mxu0 %v1737
        %1795 = vmatpush1.msra.mxu0 %v1736
        %1796 = vmatprep.subr.mxu0 %v1739
        %1797 = vmatpush1.msra.mxu0 %v1738
        %1798 = vmatprep.subr.mxu0 %v1741
        %1799 = vmatpush1.msra.mxu0 %v1740
        %1800 = vmatprep.subr.mxu0 %v1743
        %1801 = vmatpush1.msra.mxu0 %v1742
        %1802 = vmatprep.subr.mxu0 %v1745
        %1803 = vmatpush1.msra.mxu0 %v1744
        %1804 = vmatprep.subr.mxu0 %v1747
        %1805 = vmatpush1.msra.mxu0 %v1746
        %1806 = vmatprep.subr.mxu0 %v1749
        %1807 = vmatpush1.msra.mxu0 %v1748
        %1808 = vmatprep.subr.mxu0 %v1751
        %1809 = vmatpush1.msra.mxu0 %v1750
        %1810 = vmatprep.subr.mxu0 %v1753
        %1811 = vmatpush1.msra.mxu0 %v1752
        %1812 = vmatprep.subr.mxu0 %v1755
        %1813 = vmatpush1.msra.mxu0 %v1754
        %1814 = vmatprep.subr.mxu0 0.0
        %1815 = vmatpush1.msra.mxu0 0.0
        %1816 = vmatprep.subr.mxu0 0.0
        %1817 = vmatpush1.msra.mxu0 0.0
        %1818 = vmatprep.subr.mxu0 0.0
        %1819 = vmatpush1.msra.mxu0 0.0
        %1820 = vmatprep.subr.mxu0 0.0
        %1821 = vmatpush1.msra.mxu0 0.0
        %1822 = vmatprep.subr.mxu0 0.0
        %1823 = vmatpush1.msra.mxu0 0.0
        %1824 = vmatprep.subr.mxu0 0.0
        %1825 = vmatpush1.msra.mxu0 0.0
        %1826 = vmatprep.subr.mxu0 0.0
        %1827 = vmatpush1.msra.mxu0 0.0
        %1828 = vmatprep.subr.mxu0 0.0
        %1829 = vmatpush1.msra.mxu0 0.0
        %1830 = vmatprep.subr.mxu0 0.0
        %1831 = vmatpush1.msra.mxu0 0.0
        %1832 = vmatprep.subr.mxu0 0.0
        %1833 = vmatpush1.msra.mxu0 0.0
        %1834 = vmatprep.subr.mxu0 0.0
        %1835 = vmatpush1.msra.mxu0 0.0
        %1836 = vmatprep.subr.mxu0 0.0
        %1837 = vmatpush1.msra.mxu0 0.0
        %1838 = vmatprep.subr.mxu0 0.0
        %1839 = vmatpush1.msra.mxu0 0.0
        %1840 = vmatprep.subr.mxu0 0.0
        %1841 = vmatpush1.msra.mxu0 0.0
        %1842 = vmatprep.subr.mxu0 0.0
        %1843 = vmatpush1.msra.mxu0 0.0
        %1844 = vmatprep.subr.mxu0 0.0
        %1845 = vmatpush1.msra.mxu0 0.0
        %1846 = vmatprep.mubr.f32.mxu0 0.0
        %1847 = vmatmul.mubr.f32.gmra.mrb[0].mxu0 %v1772
        %v1848 = vpop.f32.mrb[0].mxu0
        %v1849 = vadd.f32 0.0, %v1848
        %v1850 = vpop.f32.mrb[0].mxu0
        %v1851 = vadd.f32 0.0, %v1850
        %1852 = vmatprep.mubr.f32.mxu0 0.0
        %1853 = vmatmul.mubr.f32.gmra.mrb[0].mxu0 %v1779
        %v1854 = vpop.f32.mrb[0].mxu0
        %v1855 = vadd.f32 0.0, %v1854
        %v1856 = vpop.f32.mrb[0].mxu0
        %v1857 = vadd.f32 0.0, %v1856
        %1858 = vdwg.mxu0
        %v1859 = vadd.f32 %v1713, %v1849
        %v1860 = vadd.f32 %v1715, %v1851
        %v1861 = vadd.f32 %v1719, %v1855
        %v1862 = vadd.f32 %v1721, %v1857
        %s1863 = scalar_lea.vmem [#allocation2], 768
        %v1864 = vld [vmem:[%s1863] sm:$0xff]
        %v1865 = vld [vmem:[%s1863 + $0x8] sm:$0xff]
        %v1866 = vld [vmem:[%s1863 + $0x10] sm:$0xff]
        %v1867 = vld [vmem:[%s1863 + $0x18] sm:$0xff]
        %v1868 = vld [vmem:[%s1863 + $0x20] sm:$0xff]
        %v1869 = vld [vmem:[%s1863 + $0x28] sm:$0xff]
        %v1870 = vld [vmem:[%s1863 + $0x30] sm:$0xff]
        %v1871 = vld [vmem:[%s1863 + $0x38] sm:$0xff]
        %v1872 = vld [vmem:[%s1863 + $0x40] sm:$0xff]
        %v1873 = vld [vmem:[%s1863 + $0x48] sm:$0xff]
        %v1874 = vld [vmem:[%s1863 + $0x50] sm:$0xff]
        %v1875 = vld [vmem:[%s1863 + $0x58] sm:$0xff]
        %v1876 = vld [vmem:[%s1863 + $0x60] sm:$0xff]
        %v1877 = vld [vmem:[%s1863 + $0x68] sm:$0xff]
        %v1878 = vld [vmem:[%s1863 + $0x70] sm:$0xff]
        %v1879 = vld [vmem:[%s1863 + $0x78] sm:$0xff]
        %v1880 = vld [vmem:[%s1863 + $0x80] sm:$0xff]
        %v1881 = vld [vmem:[%s1863 + $0x88] sm:$0xff]
        %v1882 = vld [vmem:[%s1863 + $0x90] sm:$0xff]
        %v1883 = vld [vmem:[%s1863 + $0x98] sm:$0xff]
        %v1884 = vld [vmem:[%s1863 + $0xa0] sm:$0xff]
        %v1885 = vld [vmem:[%s1863 + $0xa8] sm:$0xff]
        %v1886 = vld [vmem:[%s1863 + $0xb0] sm:$0xff]
        %v1887 = vld [vmem:[%s1863 + $0xb8] sm:$0xff]
        %v1888 = vld [vmem:[%s1863 + $0xc0] sm:$0xff]
        %v1889 = vld [vmem:[%s1863 + $0xc8] sm:$0xff]
        %v1890 = vld [vmem:[%s1863 + $0xd0] sm:$0xff]
        %v1891 = vld [vmem:[%s1863 + $0xd8] sm:$0xff]
        %v1892 = vld [vmem:[%s1863 + $0xe0] sm:$0xff]
        %v1893 = vld [vmem:[%s1863 + $0xe8] sm:$0xff]
        %v1894 = vld [vmem:[%s1863 + $0xf0] sm:$0xff]
        %v1895 = vld [vmem:[%s1863 + $0xf8] sm:$0xff]
        %v1898 = vlaneseq
        %v1899 = vshrl.u32 %v1898, 7
        %v1900 = vsub.s32 0, %v1899
        %v1901 = vrot.slane %v1361, %v1900
        %v1902 = vlaneseq
        %v1903 = vshrl.u32 %v1902, 7
        %v1904 = vsub.s32 0, %v1903
        %v1905 = vrot.slane %v1373, %v1904
        %v1906 = vsel %vm1520, %v1471, %v1467
        %v1907 = vsel %vm1522, %v1475, %v1906
        %v1908 = vsel %vm1524, %v1479, %v1907
        %v1909 = vsel %vm1526, %v1483, %v1908
        %v1910 = vsel %vm1528, %v1487, %v1909
        %v1911 = vsel %vm1530, %v1761, %v1910
        %v1912 = vsel %vm1532, %v1901, %v1911
        %v1913 = vsel %vm1520, %v1503, %v1499
        %v1914 = vsel %vm1522, %v1507, %v1913
        %v1915 = vsel %vm1524, %v1511, %v1914
        %v1916 = vsel %vm1526, %v1515, %v1915
        %v1917 = vsel %vm1528, %v1519, %v1916
        %v1918 = vsel %vm1530, %v1765, %v1917
        %v1919 = vsel %vm1532, %v1905, %v1918
        %1922 = vmatprep.subr.mxu0 %v1865
        %1923 = vmatpush1.msra.mxu0 %v1864
        %1924 = vmatprep.subr.mxu0 %v1867
        %1925 = vmatpush1.msra.mxu0 %v1866
        %1926 = vmatprep.subr.mxu0 %v1869
        %1927 = vmatpush1.msra.mxu0 %v1868
        %1928 = vmatprep.subr.mxu0 %v1871
        %1929 = vmatpush1.msra.mxu0 %v1870
        %1930 = vmatprep.subr.mxu0 %v1873
        %1931 = vmatpush1.msra.mxu0 %v1872
        %1932 = vmatprep.subr.mxu0 %v1875
        %1933 = vmatpush1.msra.mxu0 %v1874
        %1934 = vmatprep.subr.mxu0 %v1877
        %1935 = vmatpush1.msra.mxu0 %v1876
        %1936 = vmatprep.subr.mxu0 %v1879
        %1937 = vmatpush1.msra.mxu0 %v1878
        %1938 = vmatprep.subr.mxu0 %v1881
        %1939 = vmatpush1.msra.mxu0 %v1880
        %1940 = vmatprep.subr.mxu0 %v1883
        %1941 = vmatpush1.msra.mxu0 %v1882
        %1942 = vmatprep.subr.mxu0 %v1885
        %1943 = vmatpush1.msra.mxu0 %v1884
        %1944 = vmatprep.subr.mxu0 %v1887
        %1945 = vmatpush1.msra.mxu0 %v1886
        %1946 = vmatprep.subr.mxu0 %v1889
        %1947 = vmatpush1.msra.mxu0 %v1888
        %1948 = vmatprep.subr.mxu0 %v1891
        %1949 = vmatpush1.msra.mxu0 %v1890
        %1950 = vmatprep.subr.mxu0 %v1893
        %1951 = vmatpush1.msra.mxu0 %v1892
        %1952 = vmatprep.subr.mxu0 %v1895
        %1953 = vmatpush1.msra.mxu0 %v1894
        %1954 = vmatprep.subr.mxu0 0.0
        %1955 = vmatpush1.msra.mxu0 0.0
        %1956 = vmatprep.subr.mxu0 0.0
        %1957 = vmatpush1.msra.mxu0 0.0
        %1958 = vmatprep.subr.mxu0 0.0
        %1959 = vmatpush1.msra.mxu0 0.0
        %1960 = vmatprep.subr.mxu0 0.0
        %1961 = vmatpush1.msra.mxu0 0.0
        %1962 = vmatprep.subr.mxu0 0.0
        %1963 = vmatpush1.msra.mxu0 0.0
        %1964 = vmatprep.subr.mxu0 0.0
        %1965 = vmatpush1.msra.mxu0 0.0
        %1966 = vmatprep.subr.mxu0 0.0
        %1967 = vmatpush1.msra.mxu0 0.0
        %1968 = vmatprep.subr.mxu0 0.0
        %1969 = vmatpush1.msra.mxu0 0.0
        %1970 = vmatprep.subr.mxu0 0.0
        %1971 = vmatpush1.msra.mxu0 0.0
        %1972 = vmatprep.subr.mxu0 0.0
        %1973 = vmatpush1.msra.mxu0 0.0
        %1974 = vmatprep.subr.mxu0 0.0
        %1975 = vmatpush1.msra.mxu0 0.0
        %1976 = vmatprep.subr.mxu0 0.0
        %1977 = vmatpush1.msra.mxu0 0.0
        %1978 = vmatprep.subr.mxu0 0.0
        %1979 = vmatpush1.msra.mxu0 0.0
        %1980 = vmatprep.subr.mxu0 0.0
        %1981 = vmatpush1.msra.mxu0 0.0
        %1982 = vmatprep.subr.mxu0 0.0
        %1983 = vmatpush1.msra.mxu0 0.0
        %1984 = vmatprep.subr.mxu0 0.0
        %1985 = vmatpush1.msra.mxu0 0.0
        %1986 = vmatprep.mubr.f32.mxu0 0.0
        %1987 = vmatmul.mubr.f32.gmra.mrb[0].mxu0 %v1912
        %v1988 = vpop.f32.mrb[0].mxu0
        %v1989 = vadd.f32 0.0, %v1988
        %v1990 = vpop.f32.mrb[0].mxu0
        %v1991 = vadd.f32 0.0, %v1990
        %1992 = vmatprep.mubr.f32.mxu0 0.0
        %1993 = vmatmul.mubr.f32.gmra.mrb[0].mxu0 %v1919
        %v1994 = vpop.f32.mrb[0].mxu0
        %v1995 = vadd.f32 0.0, %v1994
        %v1996 = vpop.f32.mrb[0].mxu0
        %v1997 = vadd.f32 0.0, %v1996
        %1998 = vdwg.mxu0
        %v1999 = vadd.f32 %v1859, %v1989
        %v2000 = vadd.f32 %v1860, %v1991
        %v2001 = vadd.f32 %v1861, %v1995
        %v2002 = vadd.f32 %v1862, %v1997
        %s2003 = scalar_lea.vmem [#allocation2], 1024
        %v2004 = vld [vmem:[%s2003] sm:$0xff]
        %v2005 = vld [vmem:[%s2003 + $0x8] sm:$0xff]
        %v2006 = vld [vmem:[%s2003 + $0x10] sm:$0xff]
        %v2007 = vld [vmem:[%s2003 + $0x18] sm:$0xff]
        %v2008 = vld [vmem:[%s2003 + $0x20] sm:$0xff]
        %v2009 = vld [vmem:[%s2003 + $0x28] sm:$0xff]
        %v2010 = vld [vmem:[%s2003 + $0x30] sm:$0xff]
        %v2011 = vld [vmem:[%s2003 + $0x38] sm:$0xff]
        %v2012 = vld [vmem:[%s2003 + $0x40] sm:$0xff]
        %v2013 = vld [vmem:[%s2003 + $0x48] sm:$0xff]
        %v2014 = vld [vmem:[%s2003 + $0x50] sm:$0xff]
        %v2015 = vld [vmem:[%s2003 + $0x58] sm:$0xff]
        %v2016 = vld [vmem:[%s2003 + $0x60] sm:$0xff]
        %v2017 = vld [vmem:[%s2003 + $0x68] sm:$0xff]
        %v2018 = vld [vmem:[%s2003 + $0x70] sm:$0xff]
        %v2019 = vld [vmem:[%s2003 + $0x78] sm:$0xff]
        %v2020 = vld [vmem:[%s2003 + $0x80] sm:$0xff]
        %v2021 = vld [vmem:[%s2003 + $0x88] sm:$0xff]
        %v2022 = vld [vmem:[%s2003 + $0x90] sm:$0xff]
        %v2023 = vld [vmem:[%s2003 + $0x98] sm:$0xff]
        %v2024 = vld [vmem:[%s2003 + $0xa0] sm:$0xff]
        %v2025 = vld [vmem:[%s2003 + $0xa8] sm:$0xff]
        %v2026 = vld [vmem:[%s2003 + $0xb0] sm:$0xff]
        %v2027 = vld [vmem:[%s2003 + $0xb8] sm:$0xff]
        %v2028 = vld [vmem:[%s2003 + $0xc0] sm:$0xff]
        %v2029 = vld [vmem:[%s2003 + $0xc8] sm:$0xff]
        %v2030 = vld [vmem:[%s2003 + $0xd0] sm:$0xff]
        %v2031 = vld [vmem:[%s2003 + $0xd8] sm:$0xff]
        %v2032 = vld [vmem:[%s2003 + $0xe0] sm:$0xff]
        %v2033 = vld [vmem:[%s2003 + $0xe8] sm:$0xff]
        %v2034 = vld [vmem:[%s2003 + $0xf0] sm:$0xff]
        %v2035 = vld [vmem:[%s2003 + $0xf8] sm:$0xff]
        %v2038 = vlaneseq
        %v2039 = vshrl.u32 %v2038, 7
        %v2040 = vsub.s32 0, %v2039
        %v2041 = vrot.slane %v1362, %v2040
        %v2042 = vlaneseq
        %v2043 = vshrl.u32 %v2042, 7
        %v2044 = vsub.s32 0, %v2043
        %v2045 = vrot.slane %v1374, %v2044
        %v2046 = vsel %vm1520, %v1475, %v1471
        %v2047 = vsel %vm1522, %v1479, %v2046
        %v2048 = vsel %vm1524, %v1483, %v2047
        %v2049 = vsel %vm1526, %v1487, %v2048
        %v2050 = vsel %vm1528, %v1761, %v2049
        %v2051 = vsel %vm1530, %v1901, %v2050
        %v2052 = vsel %vm1532, %v2041, %v2051
        %v2053 = vsel %vm1520, %v1507, %v1503
        %v2054 = vsel %vm1522, %v1511, %v2053
        %v2055 = vsel %vm1524, %v1515, %v2054
        %v2056 = vsel %vm1526, %v1519, %v2055
        %v2057 = vsel %vm1528, %v1765, %v2056
        %v2058 = vsel %vm1530, %v1905, %v2057
        %v2059 = vsel %vm1532, %v2045, %v2058
        %2062 = vmatprep.subr.mxu0 %v2005
        %2063 = vmatpush1.msra.mxu0 %v2004
        %2064 = vmatprep.subr.mxu0 %v2007
        %2065 = vmatpush1.msra.mxu0 %v2006
        %2066 = vmatprep.subr.mxu0 %v2009
        %2067 = vmatpush1.msra.mxu0 %v2008
        %2068 = vmatprep.subr.mxu0 %v2011
        %2069 = vmatpush1.msra.mxu0 %v2010
        %2070 = vmatprep.subr.mxu0 %v2013
        %2071 = vmatpush1.msra.mxu0 %v2012
        %2072 = vmatprep.subr.mxu0 %v2015
        %2073 = vmatpush1.msra.mxu0 %v2014
        %2074 = vmatprep.subr.mxu0 %v2017
        %2075 = vmatpush1.msra.mxu0 %v2016
        %2076 = vmatprep.subr.mxu0 %v2019
        %2077 = vmatpush1.msra.mxu0 %v2018
        %2078 = vmatprep.subr.mxu0 %v2021
        %2079 = vmatpush1.msra.mxu0 %v2020
        %2080 = vmatprep.subr.mxu0 %v2023
        %2081 = vmatpush1.msra.mxu0 %v2022
        %2082 = vmatprep.subr.mxu0 %v2025
        %2083 = vmatpush1.msra.mxu0 %v2024
        %2084 = vmatprep.subr.mxu0 %v2027
        %2085 = vmatpush1.msra.mxu0 %v2026
        %2086 = vmatprep.subr.mxu0 %v2029
        %2087 = vmatpush1.msra.mxu0 %v2028
        %2088 = vmatprep.subr.mxu0 %v2031
        %2089 = vmatpush1.msra.mxu0 %v2030
        %2090 = vmatprep.subr.mxu0 %v2033
        %2091 = vmatpush1.msra.mxu0 %v2032
        %2092 = vmatprep.subr.mxu0 %v2035
        %2093 = vmatpush1.msra.mxu0 %v2034
        %2094 = vmatprep.subr.mxu0 0.0
        %2095 = vmatpush1.msra.mxu0 0.0
        %2096 = vmatprep.subr.mxu0 0.0
        %2097 = vmatpush1.msra.mxu0 0.0
        %2098 = vmatprep.subr.mxu0 0.0
        %2099 = vmatpush1.msra.mxu0 0.0
        %2100 = vmatprep.subr.mxu0 0.0
        %2101 = vmatpush1.msra.mxu0 0.0
        %2102 = vmatprep.subr.mxu0 0.0
        %2103 = vmatpush1.msra.mxu0 0.0
        %2104 = vmatprep.subr.mxu0 0.0
        %2105 = vmatpush1.msra.mxu0 0.0
        %2106 = vmatprep.subr.mxu0 0.0
        %2107 = vmatpush1.msra.mxu0 0.0
        %2108 = vmatprep.subr.mxu0 0.0
        %2109 = vmatpush1.msra.mxu0 0.0
        %2110 = vmatprep.subr.mxu0 0.0
        %2111 = vmatpush1.msra.mxu0 0.0
        %2112 = vmatprep.subr.mxu0 0.0
        %2113 = vmatpush1.msra.mxu0 0.0
        %2114 = vmatprep.subr.mxu0 0.0
        %2115 = vmatpush1.msra.mxu0 0.0
        %2116 = vmatprep.subr.mxu0 0.0
        %2117 = vmatpush1.msra.mxu0 0.0
        %2118 = vmatprep.subr.mxu0 0.0
        %2119 = vmatpush1.msra.mxu0 0.0
        %2120 = vmatprep.subr.mxu0 0.0
        %2121 = vmatpush1.msra.mxu0 0.0
        %2122 = vmatprep.subr.mxu0 0.0
        %2123 = vmatpush1.msra.mxu0 0.0
        %2124 = vmatprep.subr.mxu0 0.0
        %2125 = vmatpush1.msra.mxu0 0.0
        %2126 = vmatprep.mubr.f32.mxu0 0.0
        %2127 = vmatmul.mubr.f32.gmra.mrb[0].mxu0 %v2052
        %v2128 = vpop.f32.mrb[0].mxu0
        %v2129 = vadd.f32 0.0, %v2128
        %v2130 = vpop.f32.mrb[0].mxu0
        %v2131 = vadd.f32 0.0, %v2130
        %2132 = vmatprep.mubr.f32.mxu0 0.0
        %2133 = vmatmul.mubr.f32.gmra.mrb[0].mxu0 %v2059
        %v2134 = vpop.f32.mrb[0].mxu0
        %v2135 = vadd.f32 0.0, %v2134
        %v2136 = vpop.f32.mrb[0].mxu0
        %v2137 = vadd.f32 0.0, %v2136
        %2138 = vdwg.mxu0
        %v2139 = vadd.f32 %v1999, %v2129
        %v2140 = vadd.f32 %v2000, %v2131
        %v2141 = vadd.f32 %v2001, %v2135
        %v2142 = vadd.f32 %v2002, %v2137
        %v2143 = vmax.f32 %v2139, %v2140
        %v2144 = vmax.f32 %v2141, %v2142
        %v2147 = vcombine.high %v2143, %v2143
        %v2149 = vunpack.c.l.s4 1983009808
        %v2150 = vunpack.c.0.s8 %v2149
        %v2151 = vlaneseq
        %v2152 = vshrl.u32 %v2151, 7
        %v2153 = vsub.s32 %v2150, %v2152
        %v2154 = vrot.slane %v2143, %v2153
        %v2156 = vunpack.c.l.s4 1983009808
        %v2157 = vunpack.c.0.s8 %v2156
        %v2158 = vlaneseq
        %v2159 = vshrl.u32 %v2158, 7
        %v2160 = vsub.s32 %v2157, %v2159
        %v2161 = vrot.slane %v2147, %v2160
        %v2162 = vcombine.high %v2154, %v2154
        %v2163 = vcombine.high %v2161, %v2161
        %v2164 = vcombine.high %v2144, %v2144
        %v2166 = vunpack.c.l.s4 1983009808
        %v2167 = vunpack.c.0.s8 %v2166
        %v2168 = vlaneseq
        %v2169 = vshrl.u32 %v2168, 7
        %v2170 = vsub.s32 %v2167, %v2169
        %v2171 = vrot.slane %v2144, %v2170
        %v2173 = vunpack.c.l.s4 1983009808
        %v2174 = vunpack.c.0.s8 %v2173
        %v2175 = vlaneseq
        %v2176 = vshrl.u32 %v2175, 7
        %v2177 = vsub.s32 %v2174, %v2176
        %v2178 = vrot.slane %v2164, %v2177
        %v2179 = vcombine.high %v2171, %v2171
        %v2180 = vcombine.high %v2178, %v2178
        %v2189 = vrot.slane %v2154, 7
        %v2190 = vrot.slane %v2189, 2
        %v2191 = vrot.slane %v2162, 7
        %v2192 = vrot.slane %v2191, 2
        %v2193 = vrot.slane %v2161, 7
        %v2194 = vrot.slane %v2193, 2
        %v2195 = vrot.slane %v2163, 7
        %v2196 = vrot.slane %v2195, 2
        %v2197 = vrot.slane %v2171, 7
        %v2198 = vrot.slane %v2197, 2
        %v2199 = vrot.slane %v2179, 7
        %v2200 = vrot.slane %v2199, 2
        %v2201 = vrot.slane %v2178, 7
        %v2202 = vrot.slane %v2201, 2
        %v2203 = vrot.slane %v2180, 7
        %v2204 = vrot.slane %v2203, 2
        %v2213 = vmax.f32 %v2154, %v2190
        %v2214 = vmax.f32 %v2162, %v2192
        %v2215 = vmax.f32 %v2161, %v2194
        %v2216 = vmax.f32 %v2163, %v2196
        %v2217 = vmax.f32 %v2171, %v2198
        %v2218 = vmax.f32 %v2179, %v2200
        %v2219 = vmax.f32 %v2178, %v2202
        %v2220 = vmax.f32 %v2180, %v2204
        %v2221 = vld [vmem:[%s4] sm:$0x1]
        %v2223 = vlaneseq
        %v2224 = vshrl.u32 %v2223, 7
        %v2225 = vsub.s32 0, %v2224
        %v2226 = vrot.slane %v2221, %v2225
        %v2228 = vunpack.c.l.s4 1983009808
        %v2229 = vunpack.c.0.s8 %v2228
        %v2230 = vlaneseq
        %v2231 = vshrl.u32 %v2230, 7
        %v2232 = vsub.s32 %v2229, %v2231
        %v2233 = vrot.slane %v2226, %v2232
        %v2234 = vcombine.high %v2233, %v2233
        %v2235 = vrot.slane %v2233, 1
        %v2236 = vrot.slane %v2234, 1
        %v2241 = vadd.f32 %v2213, %v2233
        %v2242 = vadd.f32 %v2214, %v2235
        %v2243 = vadd.f32 %v2215, %v2234
        %v2244 = vadd.f32 %v2216, %v2236
        %v2245 = vadd.f32 %v2217, %v2233
        %v2246 = vadd.f32 %v2218, %v2235
        %v2247 = vadd.f32 %v2219, %v2234
        %v2248 = vadd.f32 %v2220, %v2236
        %v2249 = vmax.f32 %v2241, 0.0
        %v2250 = vmax.f32 %v2242, 0.0
        %v2251 = vmax.f32 %v2243, 0.0
        %v2252 = vmax.f32 %v2244, 0.0
        %v2253 = vmax.f32 %v2245, 0.0
        %v2254 = vmax.f32 %v2246, 0.0
        %v2255 = vmax.f32 %v2247, 0.0
        %v2256 = vmax.f32 %v2248, 0.0
        %v2257 = vld [vmem:[%s5] sm:$0xff]
        %v2258 = vld [vmem:[%s5 + $0x8] sm:$0xff]
        %v2259 = vld [vmem:[%s5 + $0x10] sm:$0xff]
        %v2260 = vld [vmem:[%s5 + $0x18] sm:$0xff]
        %v2261 = vld [vmem:[%s5 + $0x20] sm:$0xff]
        %v2262 = vld [vmem:[%s5 + $0x28] sm:$0xff]
        %v2263 = vld [vmem:[%s5 + $0x30] sm:$0xff]
        %v2264 = vld [vmem:[%s5 + $0x38] sm:$0xff]
        %v2265 = vld [vmem:[%s5 + $0x40] sm:$0xff]
        %v2266 = vld [vmem:[%s5 + $0x48] sm:$0xff]
        %v2267 = vld [vmem:[%s5 + $0x50] sm:$0xff]
        %v2268 = vld [vmem:[%s5 + $0x58] sm:$0xff]
        %v2269 = vld [vmem:[%s5 + $0x60] sm:$0xff]
        %v2270 = vld [vmem:[%s5 + $0x68] sm:$0xff]
        %v2271 = vld [vmem:[%s5 + $0x70] sm:$0xff]
        %v2272 = vld [vmem:[%s5 + $0x78] sm:$0xff]
        %s2273 = scalar_lea.vmem %s5, 128
        %v2274 = vld [vmem:[%s2273] sm:$0xff]
        %v2275 = vld [vmem:[%s2273 + $0x8] sm:$0xff]
        %v2276 = vld [vmem:[%s2273 + $0x10] sm:$0xff]
        %v2277 = vld [vmem:[%s2273 + $0x18] sm:$0xff]
        %v2278 = vld [vmem:[%s2273 + $0x20] sm:$0xff]
        %v2279 = vld [vmem:[%s2273 + $0x28] sm:$0xff]
        %v2280 = vld [vmem:[%s2273 + $0x30] sm:$0xff]
        %v2281 = vld [vmem:[%s2273 + $0x38] sm:$0xff]
        %v2282 = vld [vmem:[%s2273 + $0x40] sm:$0xff]
        %v2283 = vld [vmem:[%s2273 + $0x48] sm:$0xff]
        %v2284 = vld [vmem:[%s2273 + $0x50] sm:$0xff]
        %v2285 = vld [vmem:[%s2273 + $0x58] sm:$0xff]
        %v2286 = vld [vmem:[%s2273 + $0x60] sm:$0xff]
        %v2287 = vld [vmem:[%s2273 + $0x68] sm:$0xff]
        %v2288 = vld [vmem:[%s2273 + $0x70] sm:$0xff]
        %v2289 = vld [vmem:[%s2273 + $0x78] sm:$0xff]
        %v2292 = vlaneseq
        %v2293 = vshrl.u32 %v2292, 7
        %v2294 = vsub.s32 0, %v2293
        %v2295 = vrot.slane %v2250, %v2294
        %v2296 = vlaneseq
        %v2297 = vshrl.u32 %v2296, 7
        %v2298 = vsub.s32 0, %v2297
        %v2299 = vrot.slane %v2254, %v2298
        %v2300 = vsel %vm1520, %v2299, %v2295
        %2302 = vmatprep.subr.mxu0 0.0
        %2303 = vmatpush1.msra.mxu0 %v2274
        %2304 = vmatprep.subr.mxu0 0.0
        %2305 = vmatpush1.msra.mxu0 %v2275
        %2306 = vmatprep.subr.mxu0 0.0
        %2307 = vmatpush1.msra.mxu0 %v2276
        %2308 = vmatprep.subr.mxu0 0.0
        %2309 = vmatpush1.msra.mxu0 %v2277
        %2310 = vmatprep.subr.mxu0 0.0
        %2311 = vmatpush1.msra.mxu0 %v2278
        %2312 = vmatprep.subr.mxu0 0.0
        %2313 = vmatpush1.msra.mxu0 %v2279
        %2314 = vmatprep.subr.mxu0 0.0
        %2315 = vmatpush1.msra.mxu0 %v2280
        %2316 = vmatprep.subr.mxu0 0.0
        %2317 = vmatpush1.msra.mxu0 %v2281
        %2318 = vmatprep.subr.mxu0 0.0
        %2319 = vmatpush1.msra.mxu0 %v2282
        %2320 = vmatprep.subr.mxu0 0.0
        %2321 = vmatpush1.msra.mxu0 %v2283
        %2322 = vmatprep.subr.mxu0 0.0
        %2323 = vmatpush1.msra.mxu0 %v2284
        %2324 = vmatprep.subr.mxu0 0.0
        %2325 = vmatpush1.msra.mxu0 %v2285
        %2326 = vmatprep.subr.mxu0 0.0
        %2327 = vmatpush1.msra.mxu0 %v2286
        %2328 = vmatprep.subr.mxu0 0.0
        %2329 = vmatpush1.msra.mxu0 %v2287
        %2330 = vmatprep.subr.mxu0 0.0
        %2331 = vmatpush1.msra.mxu0 %v2288
        %2332 = vmatprep.subr.mxu0 0.0
        %2333 = vmatpush1.msra.mxu0 %v2289
        %2334 = vmatprep.subr.mxu0 0.0
        %2335 = vmatpush1.msra.mxu0 0.0
        %2336 = vmatprep.subr.mxu0 0.0
        %2337 = vmatpush1.msra.mxu0 0.0
        %2338 = vmatprep.subr.mxu0 0.0
        %2339 = vmatpush1.msra.mxu0 0.0
        %2340 = vmatprep.subr.mxu0 0.0
        %2341 = vmatpush1.msra.mxu0 0.0
        %2342 = vmatprep.subr.mxu0 0.0
        %2343 = vmatpush1.msra.mxu0 0.0
        %2344 = vmatprep.subr.mxu0 0.0
        %2345 = vmatpush1.msra.mxu0 0.0
        %2346 = vmatprep.subr.mxu0 0.0
        %2347 = vmatpush1.msra.mxu0 0.0
        %2348 = vmatprep.subr.mxu0 0.0
        %2349 = vmatpush1.msra.mxu0 0.0
        %2350 = vmatprep.subr.mxu0 0.0
        %2351 = vmatpush1.msra.mxu0 0.0
        %2352 = vmatprep.subr.mxu0 0.0
        %2353 = vmatpush1.msra.mxu0 0.0
        %2354 = vmatprep.subr.mxu0 0.0
        %2355 = vmatpush1.msra.mxu0 0.0
        %2356 = vmatprep.subr.mxu0 0.0
        %2357 = vmatpush1.msra.mxu0 0.0
        %2358 = vmatprep.subr.mxu0 0.0
        %2359 = vmatpush1.msra.mxu0 0.0
        %2360 = vmatprep.subr.mxu0 0.0
        %2361 = vmatpush1.msra.mxu0 0.0
        %2362 = vmatprep.subr.mxu0 0.0
        %2363 = vmatpush1.msra.mxu0 0.0
        %2364 = vmatprep.subr.mxu0 0.0
        %2365 = vmatpush1.msra.mxu0 0.0
        %2366 = vmatprep.mubr.f32.mxu0 0.0
        %2367 = vmatmul.mubr.f32.gmra.mrb[0].mxu0 %v2300
        %v2368 = vpop.f32.mrb[0].mxu0
        %v2369 = vadd.f32 0.0, %v2368
        %v2370 = vpop.f32.mrb[0].mxu0
        %2371 = vdwg.mxu0
        %v2374 = vlaneseq
        %v2375 = vshrl.u32 %v2374, 7
        %v2376 = vsub.s32 0, %v2375
        %v2377 = vrot.slane %v2249, %v2376
        %v2378 = vlaneseq
        %v2379 = vshrl.u32 %v2378, 7
        %v2380 = vsub.s32 0, %v2379
        %v2381 = vrot.slane %v2253, %v2380
        %v2382 = vsel %vm1520, %v2381, %v2377
        %2384 = vmatprep.subr.mxu0 0.0
        %2385 = vmatpush1.msra.mxu0 %v2257
        %2386 = vmatprep.subr.mxu0 0.0
        %2387 = vmatpush1.msra.mxu0 %v2258
        %2388 = vmatprep.subr.mxu0 0.0
        %2389 = vmatpush1.msra.mxu0 %v2259
        %2390 = vmatprep.subr.mxu0 0.0
        %2391 = vmatpush1.msra.mxu0 %v2260
        %2392 = vmatprep.subr.mxu0 0.0
        %2393 = vmatpush1.msra.mxu0 %v2261
        %2394 = vmatprep.subr.mxu0 0.0
        %2395 = vmatpush1.msra.mxu0 %v2262
        %2396 = vmatprep.subr.mxu0 0.0
        %2397 = vmatpush1.msra.mxu0 %v2263
        %2398 = vmatprep.subr.mxu0 0.0
        %2399 = vmatpush1.msra.mxu0 %v2264
        %2400 = vmatprep.subr.mxu0 0.0
        %2401 = vmatpush1.msra.mxu0 %v2265
        %2402 = vmatprep.subr.mxu0 0.0
        %2403 = vmatpush1.msra.mxu0 %v2266
        %2404 = vmatprep.subr.mxu0 0.0
        %2405 = vmatpush1.msra.mxu0 %v2267
        %2406 = vmatprep.subr.mxu0 0.0
        %2407 = vmatpush1.msra.mxu0 %v2268
        %2408 = vmatprep.subr.mxu0 0.0
        %2409 = vmatpush1.msra.mxu0 %v2269
        %2410 = vmatprep.subr.mxu0 0.0
        %2411 = vmatpush1.msra.mxu0 %v2270
        %2412 = vmatprep.subr.mxu0 0.0
        %2413 = vmatpush1.msra.mxu0 %v2271
        %2414 = vmatprep.subr.mxu0 0.0
        %2415 = vmatpush1.msra.mxu0 %v2272
        %2416 = vmatprep.subr.mxu0 0.0
        %2417 = vmatpush1.msra.mxu0 0.0
        %2418 = vmatprep.subr.mxu0 0.0
        %2419 = vmatpush1.msra.mxu0 0.0
        %2420 = vmatprep.subr.mxu0 0.0
        %2421 = vmatpush1.msra.mxu0 0.0
        %2422 = vmatprep.subr.mxu0 0.0
        %2423 = vmatpush1.msra.mxu0 0.0
        %2424 = vmatprep.subr.mxu0 0.0
        %2425 = vmatpush1.msra.mxu0 0.0
        %2426 = vmatprep.subr.mxu0 0.0
        %2427 = vmatpush1.msra.mxu0 0.0
        %2428 = vmatprep.subr.mxu0 0.0
        %2429 = vmatpush1.msra.mxu0 0.0
        %2430 = vmatprep.subr.mxu0 0.0
        %2431 = vmatpush1.msra.mxu0 0.0
        %2432 = vmatprep.subr.mxu0 0.0
        %2433 = vmatpush1.msra.mxu0 0.0
        %2434 = vmatprep.subr.mxu0 0.0
        %2435 = vmatpush1.msra.mxu0 0.0
        %2436 = vmatprep.subr.mxu0 0.0
        %2437 = vmatpush1.msra.mxu0 0.0
        %2438 = vmatprep.subr.mxu0 0.0
        %2439 = vmatpush1.msra.mxu0 0.0
        %2440 = vmatprep.subr.mxu0 0.0
        %2441 = vmatpush1.msra.mxu0 0.0
        %2442 = vmatprep.subr.mxu0 0.0
        %2443 = vmatpush1.msra.mxu0 0.0
        %2444 = vmatprep.subr.mxu0 0.0
        %2445 = vmatpush1.msra.mxu0 0.0
        %2446 = vmatprep.subr.mxu0 0.0
        %2447 = vmatpush1.msra.mxu0 0.0
        %2448 = vmatprep.mubr.f32.mxu0 0.0
        %2449 = vmatmul.mubr.f32.gmra.mrb[0].mxu0 %v2382
        %v2450 = vpop.f32.mrb[0].mxu0
        %v2451 = vadd.f32 %v2369, %v2450
        %v2452 = vpop.f32.mrb[0].mxu0
        %2453 = vdwg.mxu0
        %s2454 = scalar_lea.vmem %s5, 256
        %v2455 = vld [vmem:[%s2454] sm:$0xff]
        %v2456 = vld [vmem:[%s2454 + $0x8] sm:$0xff]
        %v2457 = vld [vmem:[%s2454 + $0x10] sm:$0xff]
        %v2458 = vld [vmem:[%s2454 + $0x18] sm:$0xff]
        %v2459 = vld [vmem:[%s2454 + $0x20] sm:$0xff]
        %v2460 = vld [vmem:[%s2454 + $0x28] sm:$0xff]
        %v2461 = vld [vmem:[%s2454 + $0x30] sm:$0xff]
        %v2462 = vld [vmem:[%s2454 + $0x38] sm:$0xff]
        %v2463 = vld [vmem:[%s2454 + $0x40] sm:$0xff]
        %v2464 = vld [vmem:[%s2454 + $0x48] sm:$0xff]
        %v2465 = vld [vmem:[%s2454 + $0x50] sm:$0xff]
        %v2466 = vld [vmem:[%s2454 + $0x58] sm:$0xff]
        %v2467 = vld [vmem:[%s2454 + $0x60] sm:$0xff]
        %v2468 = vld [vmem:[%s2454 + $0x68] sm:$0xff]
        %v2469 = vld [vmem:[%s2454 + $0x70] sm:$0xff]
        %v2470 = vld [vmem:[%s2454 + $0x78] sm:$0xff]
        %v2473 = vlaneseq
        %v2474 = vshrl.u32 %v2473, 7
        %v2475 = vsub.s32 0, %v2474
        %v2476 = vrot.slane %v2251, %v2475
        %v2477 = vlaneseq
        %v2478 = vshrl.u32 %v2477, 7
        %v2479 = vsub.s32 0, %v2478
        %v2480 = vrot.slane %v2255, %v2479
        %v2481 = vsel %vm1520, %v2480, %v2476
        %2483 = vmatprep.subr.mxu0 0.0
        %2484 = vmatpush1.msra.mxu0 %v2455
        %2485 = vmatprep.subr.mxu0 0.0
        %2486 = vmatpush1.msra.mxu0 %v2456
        %2487 = vmatprep.subr.mxu0 0.0
        %2488 = vmatpush1.msra.mxu0 %v2457
        %2489 = vmatprep.subr.mxu0 0.0
        %2490 = vmatpush1.msra.mxu0 %v2458
        %2491 = vmatprep.subr.mxu0 0.0
        %2492 = vmatpush1.msra.mxu0 %v2459
        %2493 = vmatprep.subr.mxu0 0.0
        %2494 = vmatpush1.msra.mxu0 %v2460
        %2495 = vmatprep.subr.mxu0 0.0
        %2496 = vmatpush1.msra.mxu0 %v2461
        %2497 = vmatprep.subr.mxu0 0.0
        %2498 = vmatpush1.msra.mxu0 %v2462
        %2499 = vmatprep.subr.mxu0 0.0
        %2500 = vmatpush1.msra.mxu0 %v2463
        %2501 = vmatprep.subr.mxu0 0.0
        %2502 = vmatpush1.msra.mxu0 %v2464
        %2503 = vmatprep.subr.mxu0 0.0
        %2504 = vmatpush1.msra.mxu0 %v2465
        %2505 = vmatprep.subr.mxu0 0.0
        %2506 = vmatpush1.msra.mxu0 %v2466
        %2507 = vmatprep.subr.mxu0 0.0
        %2508 = vmatpush1.msra.mxu0 %v2467
        %2509 = vmatprep.subr.mxu0 0.0
        %2510 = vmatpush1.msra.mxu0 %v2468
        %2511 = vmatprep.subr.mxu0 0.0
        %2512 = vmatpush1.msra.mxu0 %v2469
        %2513 = vmatprep.subr.mxu0 0.0
        %2514 = vmatpush1.msra.mxu0 %v2470
        %2515 = vmatprep.subr.mxu0 0.0
        %2516 = vmatpush1.msra.mxu0 0.0
        %2517 = vmatprep.subr.mxu0 0.0
        %2518 = vmatpush1.msra.mxu0 0.0
        %2519 = vmatprep.subr.mxu0 0.0
        %2520 = vmatpush1.msra.mxu0 0.0
        %2521 = vmatprep.subr.mxu0 0.0
        %2522 = vmatpush1.msra.mxu0 0.0
        %2523 = vmatprep.subr.mxu0 0.0
        %2524 = vmatpush1.msra.mxu0 0.0
        %2525 = vmatprep.subr.mxu0 0.0
        %2526 = vmatpush1.msra.mxu0 0.0
        %2527 = vmatprep.subr.mxu0 0.0
        %2528 = vmatpush1.msra.mxu0 0.0
        %2529 = vmatprep.subr.mxu0 0.0
        %2530 = vmatpush1.msra.mxu0 0.0
        %2531 = vmatprep.subr.mxu0 0.0
        %2532 = vmatpush1.msra.mxu0 0.0
        %2533 = vmatprep.subr.mxu0 0.0
        %2534 = vmatpush1.msra.mxu0 0.0
        %2535 = vmatprep.subr.mxu0 0.0
        %2536 = vmatpush1.msra.mxu0 0.0
        %2537 = vmatprep.subr.mxu0 0.0
        %2538 = vmatpush1.msra.mxu0 0.0
        %2539 = vmatprep.subr.mxu0 0.0
        %2540 = vmatpush1.msra.mxu0 0.0
        %2541 = vmatprep.subr.mxu0 0.0
        %2542 = vmatpush1.msra.mxu0 0.0
        %2543 = vmatprep.subr.mxu0 0.0
        %2544 = vmatpush1.msra.mxu0 0.0
        %2545 = vmatprep.subr.mxu0 0.0
        %2546 = vmatpush1.msra.mxu0 0.0
        %2547 = vmatprep.mubr.f32.mxu0 0.0
        %2548 = vmatmul.mubr.f32.gmra.mrb[0].mxu0 %v2481
        %v2549 = vpop.f32.mrb[0].mxu0
        %v2550 = vadd.f32 0.0, %v2549
        %v2551 = vpop.f32.mrb[0].mxu0
        %2552 = vdwg.mxu0
        %v2553 = vadd.f32 %v2451, %v2550
        %s2554 = scalar_lea.vmem %s5, 384
        %v2555 = vld [vmem:[%s2554] sm:$0xff]
        %v2556 = vld [vmem:[%s2554 + $0x8] sm:$0xff]
        %v2557 = vld [vmem:[%s2554 + $0x10] sm:$0xff]
        %v2558 = vld [vmem:[%s2554 + $0x18] sm:$0xff]
        %v2559 = vld [vmem:[%s2554 + $0x20] sm:$0xff]
        %v2560 = vld [vmem:[%s2554 + $0x28] sm:$0xff]
        %v2561 = vld [vmem:[%s2554 + $0x30] sm:$0xff]
        %v2562 = vld [vmem:[%s2554 + $0x38] sm:$0xff]
        %v2563 = vld [vmem:[%s2554 + $0x40] sm:$0xff]
        %v2564 = vld [vmem:[%s2554 + $0x48] sm:$0xff]
        %v2565 = vld [vmem:[%s2554 + $0x50] sm:$0xff]
        %v2566 = vld [vmem:[%s2554 + $0x58] sm:$0xff]
        %v2567 = vld [vmem:[%s2554 + $0x60] sm:$0xff]
        %v2568 = vld [vmem:[%s2554 + $0x68] sm:$0xff]
        %v2569 = vld [vmem:[%s2554 + $0x70] sm:$0xff]
        %v2570 = vld [vmem:[%s2554 + $0x78] sm:$0xff]
        %v2573 = vlaneseq
        %v2574 = vshrl.u32 %v2573, 7
        %v2575 = vsub.s32 0, %v2574
        %v2576 = vrot.slane %v2252, %v2575
        %v2577 = vlaneseq
        %v2578 = vshrl.u32 %v2577, 7
        %v2579 = vsub.s32 0, %v2578
        %v2580 = vrot.slane %v2256, %v2579
        %v2581 = vsel %vm1520, %v2580, %v2576
        %2583 = vmatprep.subr.mxu0 0.0
        %2584 = vmatpush1.msra.mxu0 %v2555
        %2585 = vmatprep.subr.mxu0 0.0
        %2586 = vmatpush1.msra.mxu0 %v2556
        %2587 = vmatprep.subr.mxu0 0.0
        %2588 = vmatpush1.msra.mxu0 %v2557
        %2589 = vmatprep.subr.mxu0 0.0
        %2590 = vmatpush1.msra.mxu0 %v2558
        %2591 = vmatprep.subr.mxu0 0.0
        %2592 = vmatpush1.msra.mxu0 %v2559
        %2593 = vmatprep.subr.mxu0 0.0
        %2594 = vmatpush1.msra.mxu0 %v2560
        %2595 = vmatprep.subr.mxu0 0.0
        %2596 = vmatpush1.msra.mxu0 %v2561
        %2597 = vmatprep.subr.mxu0 0.0
        %2598 = vmatpush1.msra.mxu0 %v2562
        %2599 = vmatprep.subr.mxu0 0.0
        %2600 = vmatpush1.msra.mxu0 %v2563
        %2601 = vmatprep.subr.mxu0 0.0
        %2602 = vmatpush1.msra.mxu0 %v2564
        %2603 = vmatprep.subr.mxu0 0.0
        %2604 = vmatpush1.msra.mxu0 %v2565
        %2605 = vmatprep.subr.mxu0 0.0
        %2606 = vmatpush1.msra.mxu0 %v2566
        %2607 = vmatprep.subr.mxu0 0.0
        %2608 = vmatpush1.msra.mxu0 %v2567
        %2609 = vmatprep.subr.mxu0 0.0
        %2610 = vmatpush1.msra.mxu0 %v2568
        %2611 = vmatprep.subr.mxu0 0.0
        %2612 = vmatpush1.msra.mxu0 %v2569
        %2613 = vmatprep.subr.mxu0 0.0
        %2614 = vmatpush1.msra.mxu0 %v2570
        %2615 = vmatprep.subr.mxu0 0.0
        %2616 = vmatpush1.msra.mxu0 0.0
        %2617 = vmatprep.subr.mxu0 0.0
        %2618 = vmatpush1.msra.mxu0 0.0
        %2619 = vmatprep.subr.mxu0 0.0
        %2620 = vmatpush1.msra.mxu0 0.0
        %2621 = vmatprep.subr.mxu0 0.0
        %2622 = vmatpush1.msra.mxu0 0.0
        %2623 = vmatprep.subr.mxu0 0.0
        %2624 = vmatpush1.msra.mxu0 0.0
        %2625 = vmatprep.subr.mxu0 0.0
        %2626 = vmatpush1.msra.mxu0 0.0
        %2627 = vmatprep.subr.mxu0 0.0
        %2628 = vmatpush1.msra.mxu0 0.0
        %2629 = vmatprep.subr.mxu0 0.0
        %2630 = vmatpush1.msra.mxu0 0.0
        %2631 = vmatprep.subr.mxu0 0.0
        %2632 = vmatpush1.msra.mxu0 0.0
        %2633 = vmatprep.subr.mxu0 0.0
        %2634 = vmatpush1.msra.mxu0 0.0
        %2635 = vmatprep.subr.mxu0 0.0
        %2636 = vmatpush1.msra.mxu0 0.0
        %2637 = vmatprep.subr.mxu0 0.0
        %2638 = vmatpush1.msra.mxu0 0.0
        %2639 = vmatprep.subr.mxu0 0.0
        %2640 = vmatpush1.msra.mxu0 0.0
        %2641 = vmatprep.subr.mxu0 0.0
        %2642 = vmatpush1.msra.mxu0 0.0
        %2643 = vmatprep.subr.mxu0 0.0
        %2644 = vmatpush1.msra.mxu0 0.0
        %2645 = vmatprep.subr.mxu0 0.0
        %2646 = vmatpush1.msra.mxu0 0.0
        %2647 = vmatprep.mubr.f32.mxu0 0.0
        %2648 = vmatmul.mubr.f32.gmra.mrb[0].mxu0 %v2581
        %v2649 = vpop.f32.mrb[0].mxu0
        %v2650 = vadd.f32 0.0, %v2649
        %v2651 = vpop.f32.mrb[0].mxu0
        %2652 = vdwg.mxu0
        %v2653 = vadd.f32 %v2553, %v2650
        %v2654 = vld [vmem:[%s6] sm:$0x1]
        %v2656 = vlaneseq
        %v2657 = vshrl.u32 %v2656, 7
        %v2658 = vsub.s32 0, %v2657
        %v2659 = vrot.slane %v2654, %v2658
        %v2661 = vadd.f32 %v2653, %v2659
        %v2662 = vmax.f32 %v2661, 0.0
        %v2663 = vld [vmem:[%s7] sm:$0xff]
        %v2664 = vld [vmem:[%s7 + $0x8] sm:$0xff]
        %v2665 = vld [vmem:[%s7 + $0x10] sm:$0xff]
        %v2666 = vld [vmem:[%s7 + $0x18] sm:$0xff]
        %v2667 = vld [vmem:[%s7 + $0x20] sm:$0xff]
        %v2668 = vld [vmem:[%s7 + $0x28] sm:$0xff]
        %v2669 = vld [vmem:[%s7 + $0x30] sm:$0xff]
        %v2670 = vld [vmem:[%s7 + $0x38] sm:$0xff]
        %v2671 = vld [vmem:[%s7 + $0x40] sm:$0xff]
        %v2672 = vld [vmem:[%s7 + $0x48] sm:$0xff]
        %v2673 = vld [vmem:[%s7 + $0x50] sm:$0xff]
        %v2674 = vld [vmem:[%s7 + $0x58] sm:$0xff]
        %v2675 = vld [vmem:[%s7 + $0x60] sm:$0xff]
        %v2676 = vld [vmem:[%s7 + $0x68] sm:$0xff]
        %v2677 = vld [vmem:[%s7 + $0x70] sm:$0xff]
        %v2678 = vld [vmem:[%s7 + $0x78] sm:$0xff]
        %v2679 = vld [vmem:[%s8] sm:$0x1]
        %v2681 = vlaneseq
        %v2682 = vshrl.u32 %v2681, 7
        %v2683 = vsub.s32 0, %v2682
        %v2684 = vrot.slane %v2679, %v2683
        %2686 = vmatprep.subr.mxu0 0.0
        %2687 = vmatpush1.msra.mxu0 %v2663
        %2688 = vmatprep.subr.mxu0 0.0
        %2689 = vmatpush1.msra.mxu0 %v2664
        %2690 = vmatprep.subr.mxu0 0.0
        %2691 = vmatpush1.msra.mxu0 %v2665
        %2692 = vmatprep.subr.mxu0 0.0
        %2693 = vmatpush1.msra.mxu0 %v2666
        %2694 = vmatprep.subr.mxu0 0.0
        %2695 = vmatpush1.msra.mxu0 %v2667
        %2696 = vmatprep.subr.mxu0 0.0
        %2697 = vmatpush1.msra.mxu0 %v2668
        %2698 = vmatprep.subr.mxu0 0.0
        %2699 = vmatpush1.msra.mxu0 %v2669
        %2700 = vmatprep.subr.mxu0 0.0
        %2701 = vmatpush1.msra.mxu0 %v2670
        %2702 = vmatprep.subr.mxu0 0.0
        %2703 = vmatpush1.msra.mxu0 %v2671
        %2704 = vmatprep.subr.mxu0 0.0
        %2705 = vmatpush1.msra.mxu0 %v2672
        %2706 = vmatprep.subr.mxu0 0.0
        %2707 = vmatpush1.msra.mxu0 %v2673
        %2708 = vmatprep.subr.mxu0 0.0
        %2709 = vmatpush1.msra.mxu0 %v2674
        %2710 = vmatprep.subr.mxu0 0.0
        %2711 = vmatpush1.msra.mxu0 %v2675
        %2712 = vmatprep.subr.mxu0 0.0
        %2713 = vmatpush1.msra.mxu0 %v2676
        %2714 = vmatprep.subr.mxu0 0.0
        %2715 = vmatpush1.msra.mxu0 %v2677
        %2716 = vmatprep.subr.mxu0 0.0
        %2717 = vmatpush1.msra.mxu0 %v2678
        %2718 = vmatprep.subr.mxu0 0.0
        %2719 = vmatpush1.msra.mxu0 0.0
        %2720 = vmatprep.subr.mxu0 0.0
        %2721 = vmatpush1.msra.mxu0 0.0
        %2722 = vmatprep.subr.mxu0 0.0
        %2723 = vmatpush1.msra.mxu0 0.0
        %2724 = vmatprep.subr.mxu0 0.0
        %2725 = vmatpush1.msra.mxu0 0.0
        %2726 = vmatprep.subr.mxu0 0.0
        %2727 = vmatpush1.msra.mxu0 0.0
        %2728 = vmatprep.subr.mxu0 0.0
        %2729 = vmatpush1.msra.mxu0 0.0
        %2730 = vmatprep.subr.mxu0 0.0
        %2731 = vmatpush1.msra.mxu0 0.0
        %2732 = vmatprep.subr.mxu0 0.0
        %2733 = vmatpush1.msra.mxu0 0.0
        %2734 = vmatprep.subr.mxu0 0.0
        %2735 = vmatpush1.msra.mxu0 0.0
        %2736 = vmatprep.subr.mxu0 0.0
        %2737 = vmatpush1.msra.mxu0 0.0
        %2738 = vmatprep.subr.mxu0 0.0
        %2739 = vmatpush1.msra.mxu0 0.0
        %2740 = vmatprep.subr.mxu0 0.0
        %2741 = vmatpush1.msra.mxu0 0.0
        %2742 = vmatprep.subr.mxu0 0.0
        %2743 = vmatpush1.msra.mxu0 0.0
        %2744 = vmatprep.subr.mxu0 0.0
        %2745 = vmatpush1.msra.mxu0 0.0
        %2746 = vmatprep.subr.mxu0 0.0
        %2747 = vmatpush1.msra.mxu0 0.0
        %2748 = vmatprep.subr.mxu0 0.0
        %2749 = vmatpush1.msra.mxu0 0.0
        %2750 = vmatprep.mubr.f32.mxu0 0.0
        %2751 = vmatmul.mubr.f32.gmra.mrb[0].mxu0 %v2662
        %v2752 = vpop.f32.mrb[0].mxu0
        %v2753 = vadd.f32 %v2684, %v2752
        %v2754 = vpop.f32.mrb[0].mxu0
        %2755 = vdwg.mxu0
        %v2756 = vmax.f32 %v2753, 0.0
        %v2759 = vunpack.c.l.s4 1966171168
        %v2760 = vunpack.c.0.s8 %v2759
        %v2761 = vlaneseq
        %v2762 = vshrl.u32 %v2761, 7
        %v2763 = vsub.s32 %v2760, %v2762
        %v2764 = vrot.slane %v2756, %v2763
        %v2765 = vcombine.high %v2764, %v2764
        %v2767 = vunpack.c.l.s4 1966171168
        %v2768 = vunpack.c.0.s8 %v2767
        %v2769 = vlaneseq
        %v2770 = vshrl.u32 %v2769, 7
        %v2771 = vsub.s32 %v2768, %v2770
        %v2772 = vrot.slane %v2764, %v2771
        %v2774 = vunpack.c.l.s4 1966171168
        %v2775 = vunpack.c.0.s8 %v2774
        %v2776 = vlaneseq
        %v2777 = vshrl.u32 %v2776, 7
        %v2778 = vsub.s32 %v2775, %v2777
        %v2779 = vrot.slane %v2765, %v2778
        %2782 = vst [vmem:[%s343] sm:$0x1] %v2772
        %2783 = vst [vmem:[%s343 + $0x1] sm:$0x1] %v2779
        %s2784 = sand.u32 %s226, 1
        %s2785 = scalar_lea.sflag [#allocation4], %s2784
        %s2786 = sand.u32 %s226, 1
        %s2787 = smul.addr %s2786, 2
        %s2788 = scalar_lea.vmem [#allocation5], %s2787
        // Predicated region
        $region61: #{mnist_convnet_forward.1} parent=55 // pred_check
          %p2789 = pneg %p236
        $region62: #{mnist_convnet_forward.1} parent=55 // pred_check_branch
          %2791 = sbr.rel (%p2789) target = $region64
        $region63: #{mnist_convnet_forward.1} parent=55 // pred_region
          %s2792 = smul.u32 2, %s24
          %s2794 = ssub.s32 32, 32
          %2795 = vsyncadd %s2785, %s2794
          %s2796 = smul.addr %s2792, 16
          %s2797 = scalar_lea.hbm %s9, %s2796
          %s2798 = sshll.u32 %s2788, 4
          %s2799 = int_to_ptr.vmem [resolvable:$true] %s2798
          %2804 = dma.vmem_to_hbm [thread:$0]  %s2799, 32, %s2797, %s2785, 16, 16, 1
        $region64: #{mnist_convnet_forward.1} parent=55 // pred_fallthru
          _
      $region56: #{mnist_convnet_forward.1} parent=5 // pred_fallthru
        _
      %p2805 = scmp.le.s32.totalorder 2, %s19
      // Predicated region
      $region65: #{mnist_convnet_forward.1} parent=5 // pred_check
        %p2806 = pneg %p2805
      $region66: #{mnist_convnet_forward.1} parent=5 // pred_check_branch
        %2808 = sbr.rel (%p2806) target = $region68
      $region67: #{mnist_convnet_forward.1} parent=5 // pred_region
        %s2809 = ssub.s32 %s19, 2
        // Predicated region
        $region69: #{mnist_convnet_forward.1} parent=67 // pred_check
          %p2810 = pneg %p242
        $region70: #{mnist_convnet_forward.1} parent=67 // pred_check_branch
          %2812 = sbr.rel (%p2810) target = $region72
        $region71: #{mnist_convnet_forward.1} parent=67 // pred_region
          %s2813 = sand.u32 %s227, 1
          %s2814 = scalar_lea.sflag [#allocation4], %s2813
          %s2815 = sand.u32 %s227, 1
          %s2816 = smul.addr %s2815, 2
          %s2817 = scalar_lea.vmem [#allocation5], %s2816
          %2818 = dma.done %s2814, 32
        $region72: #{mnist_convnet_forward.1} parent=67 // pred_fallthru
          _
      $region68: #{mnist_convnet_forward.1} parent=5 // pred_fallthru
        _
    $region6: #{mnist_convnet_forward.1} parent=1 // loop_footer
      %s23 = sadd.s32 1, %s19
    $region7: #{mnist_convnet_forward.1} parent=1 // loop_footer_branch
      %18 = sbr.rel target = $region3
    $region8: #{mnist_convnet_forward.1} parent=1 // loop_exit
      _
    %2819 = vsyncpa [#allocation3], 1
    %s2820 = scalar_lea.sflag [#allocation3], 1
    %2821 = vsyncpa %s2820, 1
    %2822 = vsyncpa [#allocation4], 1
    %s2823 = scalar_lea.sflag [#allocation4], 1
    %2824 = vsyncpa %s2823, 1

</llo_original>
